<compile_context>
chip_gen: v6e
topology: v6e:2x2x1
jax: 0.10.0
libtpu: 0.0.40
codegen_flags: <defaults>
</compile_context>

<pallas_src>
import functools

import jax
import jax.numpy as jnp
from jax import lax
from jax.experimental import pallas as pl
from jax.experimental.pallas import tpu as pltpu


def _round_up(x, m):
    return ((x + m - 1) // m) * m


def _det_loss_kernel(logits_ref, bbox_ref, gtab_ref, gtabT_ref, dflt_ref,
                     out_ref, *, n_anchors, iou_pos, iou_neg_upper, cls_bf16):
    logits_nc = logits_ref[0]        # (tN, C)  native dtype (bf16 or f32)
    bbox_nc = bbox_ref[0]            # (tN, 4)  native dtype, cx cy w h
    gtab = gtab_ref[0]               # (G, 8)   f32: x1 y1 x2 y2 label valid 0 0
    gtabT = gtabT_ref[0]             # (8, G)   f32 transposed table (MXU lhs)
    dT = dflt_ref[...]               # (4, tN)  f32 default boxes, xyxy rows

    tN = dT.shape[1]
    C = logits_nc.shape[1]
    G = gtab.shape[0]
    cls_dtype = jnp.bfloat16 if cls_bf16 else jnp.float32

    # Ragged-tail mask: the grid may overrun N when tN does not divide it.
    t = pl.program_id(1)
    lane = lax.broadcasted_iota(jnp.int32, (1, tN), 1)
    anchor_valid = (t * tN + lane) < n_anchors                      # (1, tN)

    # ---- layout flip (anchors -> lanes) on the otherwise-idle MXU.
    # X^T = eye @ X with the rhs contracted on its minor dim (the flash-attn
    # Q@K^T dimension_numbers); exact for a one-hot eye.  This replaces the
    # wrapper-side HBM transpose copies.
    eye_c = (lax.broadcasted_iota(jnp.int32, (C, C), 0) ==
             lax.broadcasted_iota(jnp.int32, (C, C), 1)).astype(logits_nc.dtype)
    logits32 = lax.dot_general(eye_c, logits_nc, (((1,), (1,)), ((), ())),
                               preferred_element_type=jnp.float32)  # (C, tN)
    eye_4 = (lax.broadcasted_iota(jnp.int32, (4, 4), 0) ==
             lax.broadcasted_iota(jnp.int32, (4, 4), 1)).astype(bbox_nc.dtype)
    bT = lax.dot_general(eye_4, bbox_nc, (((1,), (1,)), ((), ())),
                         preferred_element_type=jnp.float32)        # (4, tN)

    # ---- IoU(gt, default): (G, tN).  Kept in f32 so the exact-compare argmax
    # below stays well defined. ----
    gx1, gy1, gx2, gy2 = gtab[:, 0:1], gtab[:, 1:2], gtab[:, 2:3], gtab[:, 3:4]
    gtv = gtab[:, 5:6]
    dx1, dy1, dx2, dy2 = dT[0:1], dT[1:2], dT[2:3], dT[3:4]
    iw = jnp.maximum(jnp.minimum(gx2, dx2) - jnp.maximum(gx1, dx1), 0.0)
    ih = jnp.maximum(jnp.minimum(gy2, dy2) - jnp.maximum(gy1, dy1), 0.0)
    inter = iw * ih
    area_g = (gx2 - gx1) * (gy2 - gy1)                   # (G, 1)
    area_d = (dx2 - dx1) * (dy2 - dy1)                   # (1, tN)
    union = jnp.maximum(area_g + area_d - inter, 1e-10)
    iou = inter / union
    iou = jnp.where(gtv > 0.0, iou, -1.0)                # padded GTs never match

    max_iou = jnp.max(iou, axis=0, keepdims=True)        # (1, tN)
    gidx = lax.broadcasted_iota(jnp.int32, (G, tN), 0)
    matched = jnp.min(jnp.where(iou == max_iou, gidx, G),
                      axis=0, keepdims=True)             # first-max argmax
    sel = (gidx == matched).astype(jnp.float32)          # (G, tN) one-hot

    pos = max_iou >= iou_pos
    # Negatives exclude the IoU [neg_upper, pos) ignore band, matching the
    # torch reference (negative_mask = iou < 0.4, positives removed).
    neg = jnp.logical_and(max_iou < iou_neg_upper, jnp.logical_not(pos))
    pos_v = jnp.logical_and(pos, anchor_valid)
    posf = pos_v.astype(jnp.float32)

    # ---- matched GT gather on the MXU: (8, G) @ (G, tN) -> (8, tN).
    # Rows 0..3 = matched xyxy, row 4 = matched label.  The one-hot gather is
    # exact under the multi-pass f32 matmul; the label is rounded below so a
    # last-ulp error can never flip it.
    matched_tab = jnp.dot(gtabT, sel, preferred_element_type=jnp.float32)

    # ---- classification target + cross entropy (per box) ----
    lab = matched_tab[4:5]                               # (1, tN)
    target_f = jnp.where(pos, lab + 1.0, 0.0)
    target = (target_f + 0.5).astype(jnp.int32)          # round, not truncate

    logits_c = logits32.astype(cls_dtype)                # (C, tN)
    m = jnp.max(logits_c, axis=0, keepdims=True)
    shifted = logits_c - m
    ex = jnp.exp(shifted)                                # bf16 EUP on v6e/v7x
    sum_ex = jnp.sum(ex.astype(jnp.float32), axis=0, keepdims=True)
    cls_iota = lax.broadcasted_iota(jnp.int32, (C, tN), 0)
    tgt_shifted = jnp.sum(
        jnp.where(cls_iota == target, shifted, 0.0).astype(jnp.float32),
        axis=0, keepdims=True)
    conf = jnp.log(sum_ex) - tgt_shifted                 # (1, tN), m cancels

    # ---- localization loss (SmoothL1 on raw xyxy, positives only) ----
    cxp, cyp, wp, hp = bT[0:1], bT[1:2], bT[2:3], bT[3:4]
    px1, py1 = cxp - 0.5 * wp, cyp - 0.5 * hp
    px2, py2 = cxp + 0.5 * wp, cyp + 0.5 * hp

    def _smooth_l1(d):
        a = jnp.abs(d)
        return jnp.where(a < 1.0, 0.5 * a * a, a - 0.5)

    loc_raw = (_smooth_l1(px1 - matched_tab[0:1]) +
               _smooth_l1(py1 - matched_tab[1:2]) +
               _smooth_l1(px2 - matched_tab[2:3]) +
               _smooth_l1(py2 - matched_tab[3:4]))

    # ---- hard-negative candidate pool (in-kernel, review item 3) ----
    # With no valid GT in the image, every box is a candidate (reference's
    # empty-GT branch); otherwise only the negatives are.
    img_has_gt = jnp.sum(gtab[:, 5:6], axis=0, keepdims=True) > 0.0   # (1, 1)
    cand = jnp.logical_and(anchor_valid,
                           jnp.logical_or(neg, jnp.logical_not(img_has_gt)))

    neg_inf = jnp.float32(-jnp.inf)
    conf_pos = jnp.where(pos_v, conf, 0.0)
    loc_out = jnp.where(pos_v, loc_raw, 0.0)
    cand_conf = jnp.where(cand, conf, neg_inf)

    # ---- single lane-dense (4, tN) store ----
    out_ref[0] = jnp.concatenate([conf_pos, loc_out, posf, cand_conf], axis=0)


def _tpu_kind():
    try:
        return jax.devices()[0].device_kind.lower()
    except Exception:
        return ""


def _tile_vmem_bytes(tN, C, G, in_bytes):
    """Rough per-step VMEM footprint (pipelined blocks + live temporaries)."""
    lane = 128
    # Double-buffered pipelined blocks (minor dims pad to 128 lanes in VMEM).
    blocks = 2 * (tN * lane * in_bytes      # (tN, C) logits block
                  + tN * lane * in_bytes    # (tN, 4) bbox block
                  + 8 * tN * 4              # (4, tN) default boxes (8-sublane pad)
                  + 8 * tN * 4              # (4, tN) packed output
                  + 2 * 8 * max(G, lane) * 4)   # gt tables
    c_sub = _round_up(max(C, 8), 8)
    g_sub = _round_up(max(G, 8), 8)
    temps = (2 * c_sub + 3 * g_sub + 24) * tN * 4
    return blocks + temps


def detection_loss(cls_logits, bbox_pred_cxcywh, gt_boxes, gt_labels, gt_valid,
                   default_boxes_xyxy, *,
                   iou_threshold_positive=0.5,
                   iou_threshold_negative_upper=0.4,
                   neg_pos_ratio=3,
                   anchor_tile=None,
                   max_hard_negatives=None,
                   use_bf16_cls=None):
    """Pallas-backed equivalent of DetectionLoss.forward.

    GT lists are passed as padded arrays (B, G, ...) + validity mask (B, G).
    cls_logits / bbox_pred are consumed in their native dtype and layout
    (B, N, C) / (B, N, 4) -- no wrapper transposes, no upcasts."""
    cls_logits = jnp.asarray(cls_logits)
    bbox_pred_cxcywh = jnp.asarray(bbox_pred_cxcywh)
    B, N, C = cls_logits.shape
    G = gt_boxes.shape[1]

    kind = _tpu_kind()
    is_v7 = ("v7" in kind) or ("7x" in kind)
    is_v6_plus = any(s in kind for s in ("v6", "v7", "7x"))
    if use_bf16_cls is None:
        use_bf16_cls = bool(is_v6_plus)       # v5e has no bf16 VALU/EUP path

    # Scoped-VMEM budget requested explicitly (v5e's default is only 16 MiB;
    # v7x has 64 MiB physical per TensorCore, v5e/v6e have 128 MiB).
    budget_bytes = (40 if is_v7 else 64) << 20

    in_bytes = jnp.dtype(cls_logits.dtype).itemsize
    if anchor_tile is None:
        tN = 128
        n_cap = _round_up(max(N, 128), 128)
        for cand in (8192, 4096, 2048, 1024, 512, 256, 128):
            if cand > n_cap:
                continue
            if _tile_vmem_bytes(cand, C, G, in_bytes) <= int(0.6 * budget_bytes):
                tN = cand
                break
    else:
        tN = max(128, (int(anchor_tile) // 128) * 128)
    # Megacore balance: make sure there are >= 2 grid steps when possible so a
    # second TensorCore (v7x) is never left idle.
    while B * (-(-N // tN)) < 2 and tN > 128:
        tN = max(128, (tN // 2 // 128) * 128)
    num_tiles = -(-N // tN)                   # pl.cdiv; ragged tail is masked

    # Small constants / tables (tiny, built once; no big-tensor copies).
    dflt_t = jnp.transpose(default_boxes_xyxy.astype(jnp.float32))     # (4, N)
    gt_table = jnp.concatenate([
        gt_boxes.astype(jnp.float32),                    # x1, y1, x2, y2
        gt_labels.astype(jnp.float32)[..., None],        # label
        gt_valid.astype(jnp.float32)[..., None],         # valid
        jnp.zeros((B, G, 2), jnp.float32),               # pad to 8 lanes
    ], axis=-1)                                          # (B, G, 8)
    gt_tableT = jnp.transpose(gt_table, (0, 2, 1))       # (B, 8, G) for the MXU

    kernel = functools.partial(
        _det_loss_kernel,
        n_anchors=int(N),
        iou_pos=float(iou_threshold_positive),
        iou_neg_upper=float(iou_threshold_negative_upper),
        cls_bf16=bool(use_bf16_cls))

    packed = pl.pallas_call(
        kernel,
        out_shape=jax.ShapeDtypeStruct((B, 4, N), jnp.float32),
        grid_spec=pltpu.PrefetchScalarGridSpec(
            num_scalar_prefetch=0,
            grid=(B, num_tiles),
            in_specs=[
                pl.BlockSpec((1, tN, C), lambda b, t: (b, t, 0)),
                pl.BlockSpec((1, tN, 4), lambda b, t: (b, t, 0)),
                pl.BlockSpec((1, G, 8), lambda b, t: (b, 0, 0)),
                pl.BlockSpec((1, 8, G), lambda b, t: (b, 0, 0)),
                pl.BlockSpec((4, tN), lambda b, t: (0, t)),
            ],
            out_specs=pl.BlockSpec((1, 4, tN), lambda b, t: (b, 0, t)),
        ),
        compiler_params=pltpu.CompilerParams(
            dimension_semantics=("parallel", "parallel"),
            vmem_limit_bytes=int(budget_bytes),
        ),
    )(cls_logits, bbox_pred_cxcywh, gt_table, gt_tableT, dflt_t)

    conf_pos = packed[:, 0, :]   # (B, N) per-box CE, already masked by pos
    loc = packed[:, 1, :]        # (B, N) per-box SmoothL1 sum, masked by pos
    pos = packed[:, 2, :]        # (B, N) positive mask (float)
    cand_conf = packed[:, 3, :]  # (B, N) CE of hard-negative candidates, -inf else

    # ---- hard negative mining + normalization (plain-JAX glue) ----
    num_pos = jnp.sum(pos, axis=1)                                   # (B,)
    has_gt = jnp.sum(gt_valid.astype(jnp.float32), axis=1) > 0       # (B,)

    if max_hard_negatives is None:
        kmax = max(int(neg_pos_ratio) * 20, int(N * 0.05), 512)
    else:
        kmax = int(max_hard_negatives)
    kmax = max(1, min(N, kmax))

    k_pos = num_pos * float(neg_pos_ratio)
    k_nopos = float(int(N * 0.05)) if neg_pos_ratio > 0 else 0.0
    k_nogt = float(min(int(neg_pos_ratio * 20), N)) if neg_pos_ratio > 0 else 0.0
    k = jnp.where(has_gt, jnp.where(num_pos > 0, k_pos, k_nopos), k_nogt)
    # TODO(synk): k is clamped to the static top-k bound kmax; if
    # num_pos*neg_pos_ratio ever exceeds kmax the hard-negative sum is
    # truncated vs. the torch reference (raise max_hard_negatives then).
    k = jnp.minimum(k, float(kmax))

    # -inf entries (non-candidates) are dropped by the isfinite check, which
    # also implements the reference's min(k, num_candidates) clamp.
    topk_vals, _ = lax.top_k(cand_conf, kmax)                        # (B, kmax)
    ranks = jnp.arange(kmax, dtype=jnp.float32)[None, :]
    keep = jnp.logical_and(ranks < k[:, None], jnp.isfinite(topk_vals))
    topk_sum = jnp.sum(jnp.where(keep, topk_vals, 0.0), axis=1)

    conf_pos_sum = jnp.sum(conf_pos, axis=1)
    batch_conf_sum = jnp.sum(conf_pos_sum + topk_sum)
    batch_loc_sum = jnp.sum(loc)
    total_pos = jnp.sum(num_pos)

    safe_pos = jnp.maximum(total_pos, 1.0)
    norm_loc = jnp.where(total_pos > 0, batch_loc_sum / safe_pos, 0.0)
    norm_conf = jnp.where(
        total_pos > 0,
        batch_conf_sum / safe_pos,
        jnp.where(batch_conf_sum > 0, batch_conf_sum / float(B * N), 0.0))
    total = norm_loc + norm_conf
    return total, norm_loc, norm_conf


if __name__ == "__main__":
    B, N, C, G = 2, 256, 21, 8
    key = jax.random.PRNGKey(0)
    k1, k2, k3, k4 = jax.random.split(key, 4)

    # Default anchors: 16x16 grid of 0.1x0.1 boxes in [0,1] coords (xyxy).
    gs = 16
    cxs = (jnp.arange(gs, dtype=jnp.float32) + 0.5) / gs
    cxg, cyg = jnp.meshgrid(cxs, cxs, indexing="ij")
    cxg, cyg = cxg.reshape(-1), cyg.reshape(-1)
    wh = 0.1
    default_boxes = jnp.stack(
        [cxg - wh / 2, cyg - wh / 2, cxg + wh / 2, cyg + wh / 2], axis=1)  # (256, 4)

    # Model-head outputs in their native bf16 (no wrapper upcast/transpose).
    cls_logits = jax.random.normal(k1, (B, N, C), jnp.float32).astype(jnp.bfloat16)
    bbox_cxcy = jax.random.uniform(k2, (B, N, 2), jnp.float32)
    bbox_wh = jax.random.uniform(k3, (B, N, 2), jnp.float32,
                                 minval=0.05, maxval=0.2)
    bbox_pred = jnp.concatenate([bbox_cxcy, bbox_wh], axis=-1).astype(jnp.bfloat16)

    # Padded ground truth: image 0 has 5 objects (slightly shifted copies of
    # some default boxes -> guaranteed positives), image 1 has no objects
    # (exercises the empty-GT branch).
    gt_boxes = jnp.zeros((B, G, 4), jnp.float32)
    gt_labels = jnp.zeros((B, G), jnp.int32)
    gt_valid = jnp.zeros((B, G), jnp.float32)
    sel_idx = jnp.array([3, 40, 77, 130, 200])
    gt_boxes = gt_boxes.at[0, :5].set(default_boxes[sel_idx] + 0.005)
    gt_labels = gt_labels.at[0, :5].set(jax.random.randint(k4, (5,), 0, C - 1))
    gt_valid = gt_valid.at[0, :5].set(1.0)

    loss_fn = jax.jit(detection_loss)
    total, loc_l, conf_l = loss_fn(cls_logits, bbox_pred, gt_boxes,
                                   gt_labels, gt_valid, default_boxes)
    jax.block_until_ready((total, loc_l, conf_l))
    assert bool(jnp.isfinite(total)) and bool(jnp.isfinite(loc_l)) \
        and bool(jnp.isfinite(conf_l))
    print("KERNEL_OK")
</pallas_src>

<mosaic_0001>
module attributes {stable_mosaic.version = 11 : i64} {
  func.func @_det_loss_kernel(%arg0: i32, %arg1: i32, %arg2: memref<1x256x21xbf16, #tpu.memory_space<vmem>>, %arg3: memref<1x256x4xbf16, #tpu.memory_space<vmem>>, %arg4: memref<1x8x8xf32, #tpu.memory_space<vmem>>, %arg5: memref<1x8x8xf32, #tpu.memory_space<vmem>>, %arg6: memref<4x256xf32, #tpu.memory_space<vmem>>, %arg7: memref<1x4x256xf32, #tpu.memory_space<vmem>>) attributes {dimension_semantics = [#tpu.dimension_semantics<parallel>, #tpu.dimension_semantics<parallel>], iteration_bounds = array<i64: 2, 1>, scalar_prefetch = 0 : i64, scratch_operands = 0 : i64, tpu.core_type = #tpu.core_type<tc>, window_params = [{transform_indices = @transform_0, window_bounds = array<i64: 1, 256, 21>}, {transform_indices = @transform_1, window_bounds = array<i64: 1, 256, 4>}, {transform_indices = @transform_2, window_bounds = array<i64: 1, 8, 8>}, {transform_indices = @transform_3, window_bounds = array<i64: 1, 8, 8>}, {transform_indices = @transform_4, window_bounds = array<i64: 4, 256>}, {transform_indices = @transform_5, window_bounds = array<i64: 1, 4, 256>}]} {
    %c0 = arith.constant 0 : index
    %c0_0 = arith.constant 0 : index
    %c0_1 = arith.constant 0 : index
    %0 = vector.load %arg2[%c0, %c0_0, %c0_1] : memref<1x256x21xbf16, #tpu.memory_space<vmem>>, vector<1x256x21xbf16>
    %1 = vector.shape_cast %0 : vector<1x256x21xbf16> to vector<256x21xbf16>
    %c0_2 = arith.constant 0 : index
    %c0_3 = arith.constant 0 : index
    %c0_4 = arith.constant 0 : index
    %2 = vector.load %arg3[%c0_2, %c0_3, %c0_4] : memref<1x256x4xbf16, #tpu.memory_space<vmem>>, vector<1x256x4xbf16>
    %3 = vector.shape_cast %2 : vector<1x256x4xbf16> to vector<256x4xbf16>
    %c0_5 = arith.constant 0 : index
    %c0_6 = arith.constant 0 : index
    %c0_7 = arith.constant 0 : index
    %4 = vector.load %arg4[%c0_5, %c0_6, %c0_7] : memref<1x8x8xf32, #tpu.memory_space<vmem>>, vector<1x8x8xf32>
    %5 = vector.shape_cast %4 : vector<1x8x8xf32> to vector<8x8xf32>
    %c0_8 = arith.constant 0 : index
    %c0_9 = arith.constant 0 : index
    %c0_10 = arith.constant 0 : index
    %6 = vector.load %arg5[%c0_8, %c0_9, %c0_10] : memref<1x8x8xf32, #tpu.memory_space<vmem>>, vector<1x8x8xf32>
    %7 = vector.shape_cast %6 : vector<1x8x8xf32> to vector<8x8xf32>
    %c0_11 = arith.constant 0 : index
    %c0_12 = arith.constant 0 : index
    %8 = vector.load %arg6[%c0_11, %c0_12] : memref<4x256xf32, #tpu.memory_space<vmem>>, vector<4x256xf32>
    %9 = tpu.iota {dimensions = array<i32: 1>} : vector<1x256xi32>
    %c256_i32 = arith.constant 256 : i32
    %10 = arith.muli %arg1, %c256_i32 : i32
    %11 = vector.broadcast %10 : i32 to vector<1x256xi32>
    %12 = arith.addi %11, %9 : vector<1x256xi32>
    %c256_i32_13 = arith.constant 256 : i32
    %13 = vector.broadcast %c256_i32_13 : i32 to vector<1x256xi32>
    %14 = arith.cmpi slt, %12, %13 : vector<1x256xi32>
    %15 = tpu.iota {dimensions = array<i32: 0>} : vector<21x21xi32>
    %16 = tpu.iota {dimensions = array<i32: 1>} : vector<21x21xi32>
    %17 = arith.cmpi eq, %15, %16 : vector<21x21xi32>
    %18 = arith.extui %17 : vector<21x21xi1> to vector<21x21xi32>
    %19 = arith.sitofp %18 : vector<21x21xi32> to vector<21x21xf32>
    %20 = arith.truncf %19 : vector<21x21xf32> to vector<21x21xbf16>
    %cst = arith.constant dense<0.000000e+00> : vector<21x256xf32>
    %21 = tpu.matmul %20, %1, %cst {dimension_numbers = #tpu.dot_dimension_numbers<[1], [1], [0], [0], [0, 0, 1, 0], [], []>} : vector<21x21xbf16>, vector<256x21xbf16>, vector<21x256xf32> -> vector<21x256xf32>
    %22 = tpu.iota {dimensions = array<i32: 0>} : vector<4x4xi32>
    %23 = tpu.iota {dimensions = array<i32: 1>} : vector<4x4xi32>
    %24 = arith.cmpi eq, %22, %23 : vector<4x4xi32>
    %25 = arith.extui %24 : vector<4x4xi1> to vector<4x4xi32>
    %26 = arith.sitofp %25 : vector<4x4xi32> to vector<4x4xf32>
    %27 = arith.truncf %26 : vector<4x4xf32> to vector<4x4xbf16>
    %cst_14 = arith.constant dense<0.000000e+00> : vector<4x256xf32>
    %28 = tpu.matmul %27, %3, %cst_14 {dimension_numbers = #tpu.dot_dimension_numbers<[1], [1], [0], [0], [0, 0, 1, 0], [], []>} : vector<4x4xbf16>, vector<256x4xbf16>, vector<4x256xf32> -> vector<4x256xf32>
    %29 = vector.extract_strided_slice %5 {offsets = [0, 0], sizes = [8, 1], strides = [1, 1]} : vector<8x8xf32> to vector<8x1xf32>
    %30 = vector.extract_strided_slice %5 {offsets = [0, 1], sizes = [8, 1], strides = [1, 1]} : vector<8x8xf32> to vector<8x1xf32>
    %31 = vector.extract_strided_slice %5 {offsets = [0, 2], sizes = [8, 1], strides = [1, 1]} : vector<8x8xf32> to vector<8x1xf32>
    %32 = vector.extract_strided_slice %5 {offsets = [0, 3], sizes = [8, 1], strides = [1, 1]} : vector<8x8xf32> to vector<8x1xf32>
    %33 = vector.extract_strided_slice %5 {offsets = [0, 5], sizes = [8, 1], strides = [1, 1]} : vector<8x8xf32> to vector<8x1xf32>
    %34 = vector.extract_strided_slice %8 {offsets = [0, 0], sizes = [1, 256], strides = [1, 1]} : vector<4x256xf32> to vector<1x256xf32>
    %35 = vector.extract_strided_slice %8 {offsets = [1, 0], sizes = [1, 256], strides = [1, 1]} : vector<4x256xf32> to vector<1x256xf32>
    %36 = vector.extract_strided_slice %8 {offsets = [2, 0], sizes = [1, 256], strides = [1, 1]} : vector<4x256xf32> to vector<1x256xf32>
    %37 = vector.extract_strided_slice %8 {offsets = [3, 0], sizes = [1, 256], strides = [1, 1]} : vector<4x256xf32> to vector<1x256xf32>
    %38 = vector.broadcast %31 : vector<8x1xf32> to vector<8x256xf32>
    %39 = vector.broadcast %36 : vector<1x256xf32> to vector<8x256xf32>
    %40 = arith.minimumf %38, %39 : vector<8x256xf32>
    %41 = vector.broadcast %29 : vector<8x1xf32> to vector<8x256xf32>
    %42 = vector.broadcast %34 : vector<1x256xf32> to vector<8x256xf32>
    %43 = arith.maximumf %41, %42 : vector<8x256xf32>
    %44 = arith.subf %40, %43 : vector<8x256xf32>
    %cst_15 = arith.constant 0.000000e+00 : f32
    %45 = vector.broadcast %cst_15 : f32 to vector<8x256xf32>
    %46 = arith.maximumf %44, %45 : vector<8x256xf32>
    %47 = vector.broadcast %32 : vector<8x1xf32> to vector<8x256xf32>
    %48 = vector.broadcast %37 : vector<1x256xf32> to vector<8x256xf32>
    %49 = arith.minimumf %47, %48 : vector<8x256xf32>
    %50 = vector.broadcast %30 : vector<8x1xf32> to vector<8x256xf32>
    %51 = vector.broadcast %35 : vector<1x256xf32> to vector<8x256xf32>
    %52 = arith.maximumf %50, %51 : vector<8x256xf32>
    %53 = arith.subf %49, %52 : vector<8x256xf32>
    %cst_16 = arith.constant 0.000000e+00 : f32
    %54 = vector.broadcast %cst_16 : f32 to vector<8x256xf32>
    %55 = arith.maximumf %53, %54 : vector<8x256xf32>
    %56 = arith.mulf %46, %55 : vector<8x256xf32>
    %57 = arith.subf %31, %29 : vector<8x1xf32>
    %58 = arith.subf %32, %30 : vector<8x1xf32>
    %59 = arith.mulf %57, %58 : vector<8x1xf32>
    %60 = arith.subf %36, %34 : vector<1x256xf32>
    %61 = arith.subf %37, %35 : vector<1x256xf32>
    %62 = arith.mulf %60, %61 : vector<1x256xf32>
    %63 = vector.broadcast %59 : vector<8x1xf32> to vector<8x256xf32>
    %64 = vector.broadcast %62 : vector<1x256xf32> to vector<8x256xf32>
    %65 = arith.addf %63, %64 : vector<8x256xf32>
    %66 = arith.subf %65, %56 : vector<8x256xf32>
    %cst_17 = arith.constant 1.000000e-10 : f32
    %67 = vector.broadcast %cst_17 : f32 to vector<8x256xf32>
    %68 = arith.maximumf %66, %67 : vector<8x256xf32>
    %69 = arith.divf %56, %68 : vector<8x256xf32>
    %cst_18 = arith.constant 0.000000e+00 : f32
    %70 = vector.broadcast %cst_18 : f32 to vector<8x1xf32>
    %71 = arith.cmpf ogt, %33, %70 : vector<8x1xf32>
    %cst_19 = arith.constant -1.000000e+00 : f32
    %72 = vector.shape_cast %71 : vector<8x1xi1> to vector<8x1xi1>
    %73 = vector.broadcast %72 : vector<8x1xi1> to vector<8x256xi1>
    %74 = vector.broadcast %cst_19 : f32 to vector<8x256xf32>
    %75 = arith.select %73, %69, %74 : vector<8x256xi1>, vector<8x256xf32>
    %cst_20 = arith.constant dense<0xFF800000> : vector<256xf32>
    %76 = vector.multi_reduction <maximumf>, %75, %cst_20 [0] : vector<8x256xf32> to vector<256xf32>
    %77 = vector.shape_cast %76 : vector<256xf32> to vector<1x256xf32>
    %78 = tpu.iota {dimensions = array<i32: 0>} : vector<8x256xi32>
    %79 = vector.broadcast %77 : vector<1x256xf32> to vector<8x256xf32>
    %80 = arith.cmpf oeq, %75, %79 : vector<8x256xf32>
    %c8_i32 = arith.constant 8 : i32
    %81 = vector.broadcast %c8_i32 : i32 to vector<8x256xi32>
    %82 = arith.select %80, %78, %81 : vector<8x256xi1>, vector<8x256xi32>
    %cst_21 = arith.constant dense<2147483647> : vector<256xi32>
    %83 = vector.multi_reduction <minsi>, %82, %cst_21 [0] : vector<8x256xi32> to vector<256xi32>
    %84 = vector.shape_cast %83 : vector<256xi32> to vector<1x256xi32>
    %85 = vector.broadcast %84 : vector<1x256xi32> to vector<8x256xi32>
    %86 = arith.cmpi eq, %78, %85 : vector<8x256xi32>
    %87 = arith.extui %86 : vector<8x256xi1> to vector<8x256xi32>
    %88 = arith.sitofp %87 : vector<8x256xi32> to vector<8x256xf32>
    %cst_22 = arith.constant 5.000000e-01 : f32
    %89 = vector.broadcast %cst_22 : f32 to vector<1x256xf32>
    %90 = arith.cmpf oge, %77, %89 : vector<1x256xf32>
    %cst_23 = arith.constant 4.000000e-01 : f32
    %91 = vector.broadcast %cst_23 : f32 to vector<1x256xf32>
    %92 = arith.cmpf olt, %77, %91 : vector<1x256xf32>
    %cst_24 = arith.constant dense<true> : vector<1x256xi1>
    %93 = arith.xori %90, %cst_24 : vector<1x256xi1>
    %94 = arith.andi %92, %93 : vector<1x256xi1>
    %95 = arith.andi %90, %14 : vector<1x256xi1>
    %96 = arith.extui %95 : vector<1x256xi1> to vector<1x256xi32>
    %97 = arith.sitofp %96 : vector<1x256xi32> to vector<1x256xf32>
    %cst_25 = arith.constant dense<0.000000e+00> : vector<8x256xf32>
    %98 = tpu.matmul %7, %88, %cst_25 {dimension_numbers = #tpu.dot_dimension_numbers<[1], [0], [0], [1], [0, 0, 1, 1], [], []>} : vector<8x8xf32>, vector<8x256xf32>, vector<8x256xf32> -> vector<8x256xf32>
    %99 = vector.extract_strided_slice %98 {offsets = [4, 0], sizes = [1, 256], strides = [1, 1]} : vector<8x256xf32> to vector<1x256xf32>
    %cst_26 = arith.constant 1.000000e+00 : f32
    %100 = vector.broadcast %cst_26 : f32 to vector<1x256xf32>
    %101 = arith.addf %99, %100 : vector<1x256xf32>
    %cst_27 = arith.constant 0.000000e+00 : f32
    %102 = vector.broadcast %cst_27 : f32 to vector<1x256xf32>
    %103 = arith.select %90, %101, %102 : vector<1x256xi1>, vector<1x256xf32>
    %cst_28 = arith.constant 5.000000e-01 : f32
    %104 = vector.broadcast %cst_28 : f32 to vector<1x256xf32>
    %105 = arith.addf %103, %104 : vector<1x256xf32>
    %106 = arith.fptosi %105 : vector<1x256xf32> to vector<1x256xi32>
    %cst_29 = arith.constant dense<0xFF800000> : vector<256xf32>
    %107 = vector.multi_reduction <maximumf>, %21, %cst_29 [0] : vector<21x256xf32> to vector<256xf32>
    %108 = vector.shape_cast %107 : vector<256xf32> to vector<1x256xf32>
    %109 = vector.broadcast %108 : vector<1x256xf32> to vector<21x256xf32>
    %110 = arith.subf %21, %109 : vector<21x256xf32>
    %111 = math.exp %110 : vector<21x256xf32>
    %cst_30 = arith.constant dense<0.000000e+00> : vector<256xf32>
    %112 = vector.multi_reduction <add>, %111, %cst_30 [0] : vector<21x256xf32> to vector<256xf32>
    %113 = vector.shape_cast %112 : vector<256xf32> to vector<1x256xf32>
    %114 = tpu.iota {dimensions = array<i32: 0>} : vector<21x256xi32>
    %115 = vector.broadcast %106 : vector<1x256xi32> to vector<21x256xi32>
    %116 = arith.cmpi eq, %114, %115 : vector<21x256xi32>
    %cst_31 = arith.constant 0.000000e+00 : f32
    %117 = vector.broadcast %cst_31 : f32 to vector<21x256xf32>
    %118 = arith.select %116, %110, %117 : vector<21x256xi1>, vector<21x256xf32>
    %cst_32 = arith.constant dense<0.000000e+00> : vector<256xf32>
    %119 = vector.multi_reduction <add>, %118, %cst_32 [0] : vector<21x256xf32> to vector<256xf32>
    %120 = vector.shape_cast %119 : vector<256xf32> to vector<1x256xf32>
    %121 = math.log %113 : vector<1x256xf32>
    %122 = arith.subf %121, %120 : vector<1x256xf32>
    %123 = vector.extract_strided_slice %28 {offsets = [0, 0], sizes = [1, 256], strides = [1, 1]} : vector<4x256xf32> to vector<1x256xf32>
    %124 = vector.extract_strided_slice %28 {offsets = [1, 0], sizes = [1, 256], strides = [1, 1]} : vector<4x256xf32> to vector<1x256xf32>
    %125 = vector.extract_strided_slice %28 {offsets = [2, 0], sizes = [1, 256], strides = [1, 1]} : vector<4x256xf32> to vector<1x256xf32>
    %126 = vector.extract_strided_slice %28 {offsets = [3, 0], sizes = [1, 256], strides = [1, 1]} : vector<4x256xf32> to vector<1x256xf32>
    %cst_33 = arith.constant 5.000000e-01 : f32
    %127 = vector.broadcast %cst_33 : f32 to vector<1x256xf32>
    %128 = arith.mulf %127, %125 : vector<1x256xf32>
    %129 = arith.subf %123, %128 : vector<1x256xf32>
    %cst_34 = arith.constant 5.000000e-01 : f32
    %130 = vector.broadcast %cst_34 : f32 to vector<1x256xf32>
    %131 = arith.mulf %130, %126 : vector<1x256xf32>
    %132 = arith.subf %124, %131 : vector<1x256xf32>
    %cst_35 = arith.constant 5.000000e-01 : f32
    %133 = vector.broadcast %cst_35 : f32 to vector<1x256xf32>
    %134 = arith.mulf %133, %125 : vector<1x256xf32>
    %135 = arith.addf %123, %134 : vector<1x256xf32>
    %cst_36 = arith.constant 5.000000e-01 : f32
    %136 = vector.broadcast %cst_36 : f32 to vector<1x256xf32>
    %137 = arith.mulf %136, %126 : vector<1x256xf32>
    %138 = arith.addf %124, %137 : vector<1x256xf32>
    %139 = vector.extract_strided_slice %98 {offsets = [0, 0], sizes = [1, 256], strides = [1, 1]} : vector<8x256xf32> to vector<1x256xf32>
    %140 = arith.subf %129, %139 : vector<1x256xf32>
    %141 = math.absf %140 : vector<1x256xf32>
    %cst_37 = arith.constant 1.000000e+00 : f32
    %142 = vector.broadcast %cst_37 : f32 to vector<1x256xf32>
    %143 = arith.cmpf olt, %141, %142 : vector<1x256xf32>
    %cst_38 = arith.constant 5.000000e-01 : f32
    %144 = vector.broadcast %cst_38 : f32 to vector<1x256xf32>
    %145 = arith.mulf %144, %141 : vector<1x256xf32>
    %146 = arith.mulf %145, %141 : vector<1x256xf32>
    %cst_39 = arith.constant 5.000000e-01 : f32
    %147 = vector.broadcast %cst_39 : f32 to vector<1x256xf32>
    %148 = arith.subf %141, %147 : vector<1x256xf32>
    %149 = arith.select %143, %146, %148 : vector<1x256xi1>, vector<1x256xf32>
    %150 = vector.extract_strided_slice %98 {offsets = [1, 0], sizes = [1, 256], strides = [1, 1]} : vector<8x256xf32> to vector<1x256xf32>
    %151 = arith.subf %132, %150 : vector<1x256xf32>
    %152 = math.absf %151 : vector<1x256xf32>
    %cst_40 = arith.constant 1.000000e+00 : f32
    %153 = vector.broadcast %cst_40 : f32 to vector<1x256xf32>
    %154 = arith.cmpf olt, %152, %153 : vector<1x256xf32>
    %cst_41 = arith.constant 5.000000e-01 : f32
    %155 = vector.broadcast %cst_41 : f32 to vector<1x256xf32>
    %156 = arith.mulf %155, %152 : vector<1x256xf32>
    %157 = arith.mulf %156, %152 : vector<1x256xf32>
    %cst_42 = arith.constant 5.000000e-01 : f32
    %158 = vector.broadcast %cst_42 : f32 to vector<1x256xf32>
    %159 = arith.subf %152, %158 : vector<1x256xf32>
    %160 = arith.select %154, %157, %159 : vector<1x256xi1>, vector<1x256xf32>
    %161 = arith.addf %149, %160 : vector<1x256xf32>
    %162 = vector.extract_strided_slice %98 {offsets = [2, 0], sizes = [1, 256], strides = [1, 1]} : vector<8x256xf32> to vector<1x256xf32>
    %163 = arith.subf %135, %162 : vector<1x256xf32>
    %164 = math.absf %163 : vector<1x256xf32>
    %cst_43 = arith.constant 1.000000e+00 : f32
    %165 = vector.broadcast %cst_43 : f32 to vector<1x256xf32>
    %166 = arith.cmpf olt, %164, %165 : vector<1x256xf32>
    %cst_44 = arith.constant 5.000000e-01 : f32
    %167 = vector.broadcast %cst_44 : f32 to vector<1x256xf32>
    %168 = arith.mulf %167, %164 : vector<1x256xf32>
    %169 = arith.mulf %168, %164 : vector<1x256xf32>
    %cst_45 = arith.constant 5.000000e-01 : f32
    %170 = vector.broadcast %cst_45 : f32 to vector<1x256xf32>
    %171 = arith.subf %164, %170 : vector<1x256xf32>
    %172 = arith.select %166, %169, %171 : vector<1x256xi1>, vector<1x256xf32>
    %173 = arith.addf %161, %172 : vector<1x256xf32>
    %174 = vector.extract_strided_slice %98 {offsets = [3, 0], sizes = [1, 256], strides = [1, 1]} : vector<8x256xf32> to vector<1x256xf32>
    %175 = arith.subf %138, %174 : vector<1x256xf32>
    %176 = math.absf %175 : vector<1x256xf32>
    %cst_46 = arith.constant 1.000000e+00 : f32
    %177 = vector.broadcast %cst_46 : f32 to vector<1x256xf32>
    %178 = arith.cmpf olt, %176, %177 : vector<1x256xf32>
    %cst_47 = arith.constant 5.000000e-01 : f32
    %179 = vector.broadcast %cst_47 : f32 to vector<1x256xf32>
    %180 = arith.mulf %179, %176 : vector<1x256xf32>
    %181 = arith.mulf %180, %176 : vector<1x256xf32>
    %cst_48 = arith.constant 5.000000e-01 : f32
    %182 = vector.broadcast %cst_48 : f32 to vector<1x256xf32>
    %183 = arith.subf %176, %182 : vector<1x256xf32>
    %184 = arith.select %178, %181, %183 : vector<1x256xi1>, vector<1x256xf32>
    %185 = arith.addf %173, %184 : vector<1x256xf32>
    %186 = vector.extract_strided_slice %5 {offsets = [0, 5], sizes = [8, 1], strides = [1, 1]} : vector<8x8xf32> to vector<8x1xf32>
    %cst_49 = arith.constant dense<0.000000e+00> : vector<1xf32>
    %187 = vector.multi_reduction <add>, %186, %cst_49 [0] : vector<8x1xf32> to vector<1xf32>
    %188 = vector.shape_cast %187 : vector<1xf32> to vector<1x1xf32>
    %cst_50 = arith.constant 0.000000e+00 : f32
    %189 = vector.broadcast %cst_50 : f32 to vector<1x1xf32>
    %190 = arith.cmpf ogt, %188, %189 : vector<1x1xf32>
    %cst_51 = arith.constant dense<true> : vector<1x1xi1>
    %191 = arith.xori %190, %cst_51 : vector<1x1xi1>
    %192 = vector.broadcast %191 : vector<1x1xi1> to vector<1x256xi1>
    %193 = arith.ori %94, %192 : vector<1x256xi1>
    %194 = arith.andi %14, %193 : vector<1x256xi1>
    %cst_52 = arith.constant 0.000000e+00 : f32
    %195 = vector.broadcast %cst_52 : f32 to vector<1x256xf32>
    %196 = arith.select %95, %122, %195 : vector<1x256xi1>, vector<1x256xf32>
    %cst_53 = arith.constant 0.000000e+00 : f32
    %197 = vector.broadcast %cst_53 : f32 to vector<1x256xf32>
    %198 = arith.select %95, %185, %197 : vector<1x256xi1>, vector<1x256xf32>
    %cst_54 = arith.constant 0xFF800000 : f32
    %199 = vector.broadcast %cst_54 : f32 to vector<1x256xf32>
    %200 = arith.select %194, %122, %199 : vector<1x256xi1>, vector<1x256xf32>
    %201 = tpu.concatenate %196, %198, %97, %200 in 0 : vector<1x256xf32>, vector<1x256xf32>, vector<1x256xf32>, vector<1x256xf32> -> vector<4x256xf32>
    %c0_55 = arith.constant 0 : index
    %c0_56 = arith.constant 0 : index
    %c0_57 = arith.constant 0 : index
    %202 = vector.load %arg7[%c0_55, %c0_56, %c0_57] : memref<1x4x256xf32, #tpu.memory_space<vmem>>, vector<1x4x256xf32>
    %203 = vector.shape_cast %202 : vector<1x4x256xf32> to vector<4x256xf32>
    %204 = vector.shape_cast %201 : vector<4x256xf32> to vector<1x4x256xf32>
    tpu.vector_store %arg7[%c0_55, %c0_56, %c0_57], %204 {strides = array<i32>} : memref<1x4x256xf32, #tpu.memory_space<vmem>>, vector<1x4x256xf32>,
    return
  }
  func.func @transform_0(%arg0: i32, %arg1: i32) -> (i32, i32, i32) {
    %c0_i32 = arith.constant 0 : i32
    %c0_i32_0 = arith.constant 0 : i32
    return %arg0, %arg1, %c0_i32 : i32, i32, i32
  }
  func.func @transform_1(%arg0: i32, %arg1: i32) -> (i32, i32, i32) {
    %c0_i32 = arith.constant 0 : i32
    %c0_i32_0 = arith.constant 0 : i32
    return %arg0, %arg1, %c0_i32 : i32, i32, i32
  }
  func.func @transform_2(%arg0: i32, %arg1: i32) -> (i32, i32, i32) {
    %c0_i32 = arith.constant 0 : i32
    %c0_i32_0 = arith.constant 0 : i32
    %c0_i32_1 = arith.constant 0 : i32
    return %arg0, %c0_i32, %c0_i32_0 : i32, i32, i32
  }
  func.func @transform_3(%arg0: i32, %arg1: i32) -> (i32, i32, i32) {
    %c0_i32 = arith.constant 0 : i32
    %c0_i32_0 = arith.constant 0 : i32
    %c0_i32_1 = arith.constant 0 : i32
    return %arg0, %c0_i32, %c0_i32_0 : i32, i32, i32
  }
  func.func @transform_4(%arg0: i32, %arg1: i32) -> (i32, i32) {
    %c0_i32 = arith.constant 0 : i32
    %c0_i32_0 = arith.constant 0 : i32
    return %c0_i32, %arg1 : i32, i32
  }
  func.func @transform_5(%arg0: i32, %arg1: i32) -> (i32, i32, i32) {
    %c0_i32 = arith.constant 0 : i32
    %c0_i32_0 = arith.constant 0 : i32
    return %arg0, %c0_i32, %arg1 : i32, i32, i32
  }
}

</mosaic_0001>

<llo_original>
// kernel: detection_loss.1
$region0: #{detection_loss.1}
  #allocation0 [shape = 'u32[]', space=smem, size = 0x4, offset = 0x4, fixed_abs, tag = 'smem constant byte address 0x4 - core index']
  #allocation1 [shape = 'u32[144,128]{1,0:T(1,128)}', space=vmem, size = 0x12000, scoped, tag = 'internal scratch']
  %s0 = inlined_call_operand.vmem [shape: bf16[2,256,21], index: 0, kind: input, shape index: {}]
  %s1 = inlined_call_operand.vmem [shape: bf16[2,256,4], index: 1, kind: input, shape index: {}]
  %s2 = inlined_call_operand.vmem [shape: f32[2,8,8], index: 2, kind: input, shape index: {}]
  %s3 = inlined_call_operand.vmem [shape: f32[2,8,8], index: 3, kind: input, shape index: {}]
  %s4 = inlined_call_operand.vmem [shape: f32[4,256], index: 4, kind: input, shape index: {}]
  %s5 = inlined_call_operand.vmem [shape: f32[2,4,256], index: 5, kind: output, shape index: {}]
  %s6 = sld [smem:[#allocation0]]
  $region53: #{detection_loss.1} parent=0
    _
  %s8 = ssub.s32 1, %s6
  %s9 = scalar_select 0, %s8, %s6
  loop: start=0, step=1, limit=4
  $region2: #{detection_loss.1} parent=0 // loop_pre_header
    _
  $region3: #{detection_loss.1} parent=0 // loop_header
    %s11 = sphi 0, %s15
    %p12 = scmp.ge.s32.totalorder %s11, 4
    %s18 = sphi 0, %s30
    %s19 = sphi 0, %s26
    %s20 = sphi 0, %s18
    %s21 = sphi 0, %s19
    %s22 = sphi 0, %s20
    %s23 = sphi 0, %s21
    %s35 = sphi 0, %s37
    %s38 = sphi 0, %s35
    %s39 = sphi 0, %s38
    %s55 = sphi 0, %s39
    %s63 = sphi 0, %s65
    %s66 = sphi 0, %s63
    %s67 = sphi 0, %s66
    %s83 = sphi 0, %s67
    %s89 = sphi 0, %s91
    %s92 = sphi 0, %s89
    %s93 = sphi 0, %s92
    %s109 = sphi 0, %s93
    %s115 = sphi 0, %s117
    %s118 = sphi 0, %s115
    %s119 = sphi 0, %s118
    %s135 = sphi 0, %s119
    %s141 = sphi 0, %s143
    %s144 = sphi 0, %s141
    %s145 = sphi 0, %s144
    %s161 = sphi 0, %s145
    %s169 = sphi 0, %s171
    %s172 = sphi 0, %s169
    %s173 = sphi 0, %s172
    %s189 = sphi 0, %s173
  $region4: #{detection_loss.1} parent=0 // loop_header_branch
    %14 = sbr.rel (%p12) target = $region8
  $region5: #{detection_loss.1} parent=0 // loop_body
    %s16 = ssub.s32 %s11, 1
    %s17 = ssub.s32 %s11, 2
    %s24 = sadd.s32 1, %s19
    %p25 = scmp.ge.s32.totalorder %s24, 1
    %s26 = scalar_select %p25, 0, %s24
    %s27 = sadd.s32 1, %s18
    %s28 = scalar_select %p25, %s27, %s18
    %p29 = scmp.ge.s32.totalorder %s28, 2
    %s30 = scalar_select %p29, 0, %s28
    %s31 = ssub.s32 %s18, %s30
    %s32 = ssub.s32 %s19, %s26
    %s33 = sor.u32 %s31, %s32
    %p34 = scmp.eq.s32.totalorder %s33, 0
    %s36 = sadd.s32 %s35, 1
    %s37 = scalar_select %p34, %s35, %s36
    %p40 = pneg %p34
    %p41 = scmp.eq.s32.totalorder %s11, 1
    %p42 = por %p40, %p41
    %p43 = scmp.ne.s32.totalorder %s35, %s38
    %p44 = scmp.eq.s32.totalorder %s11, 0
    %p45 = por %p43, %p44
    %p46 = scmp.ne.s32.totalorder %s35, %s38
    %p47 = scmp.eq.s32.totalorder %s16, 1
    %p48 = por %p46, %p47
    %p49 = scmp.ne.s32.totalorder %s38, %s39
    %p50 = scmp.eq.s32.totalorder %s16, 0
    %p51 = por %p49, %p50
    %p52 = scmp.ne.s32.totalorder %s38, %s39
    %p53 = scmp.eq.s32.totalorder %s17, 1
    %p54 = por %p52, %p53
    %p56 = scmp.ne.s32.totalorder %s39, %s55
    %p57 = scmp.eq.s32.totalorder %s17, 0
    %p58 = por %p56, %p57
    %s59 = ssub.s32 %s18, %s30
    %s60 = ssub.s32 %s19, %s26
    %s61 = sor.u32 %s59, %s60
    %p62 = scmp.eq.s32.totalorder %s61, 0
    %s64 = sadd.s32 %s63, 1
    %s65 = scalar_select %p62, %s63, %s64
    %p68 = pneg %p62
    %p69 = scmp.eq.s32.totalorder %s11, 1
    %p70 = por %p68, %p69
    %p71 = scmp.ne.s32.totalorder %s63, %s66
    %p72 = scmp.eq.s32.totalorder %s11, 0
    %p73 = por %p71, %p72
    %p74 = scmp.ne.s32.totalorder %s63, %s66
    %p75 = scmp.eq.s32.totalorder %s16, 1
    %p76 = por %p74, %p75
    %p77 = scmp.ne.s32.totalorder %s66, %s67
    %p78 = scmp.eq.s32.totalorder %s16, 0
    %p79 = por %p77, %p78
    %p80 = scmp.ne.s32.totalorder %s66, %s67
    %p81 = scmp.eq.s32.totalorder %s17, 1
    %p82 = por %p80, %p81
    %p84 = scmp.ne.s32.totalorder %s67, %s83
    %p85 = scmp.eq.s32.totalorder %s17, 0
    %p86 = por %p84, %p85
    %s87 = ssub.s32 %s18, %s30
    %p88 = scmp.eq.s32.totalorder %s87, 0
    %s90 = sadd.s32 %s89, 1
    %s91 = scalar_select %p88, %s89, %s90
    %p94 = pneg %p88
    %p95 = scmp.eq.s32.totalorder %s11, 1
    %p96 = por %p94, %p95
    %p97 = scmp.ne.s32.totalorder %s89, %s92
    %p98 = scmp.eq.s32.totalorder %s11, 0
    %p99 = por %p97, %p98
    %p100 = scmp.ne.s32.totalorder %s89, %s92
    %p101 = scmp.eq.s32.totalorder %s16, 1
    %p102 = por %p100, %p101
    %p103 = scmp.ne.s32.totalorder %s92, %s93
    %p104 = scmp.eq.s32.totalorder %s16, 0
    %p105 = por %p103, %p104
    %p106 = scmp.ne.s32.totalorder %s92, %s93
    %p107 = scmp.eq.s32.totalorder %s17, 1
    %p108 = por %p106, %p107
    %p110 = scmp.ne.s32.totalorder %s93, %s109
    %p111 = scmp.eq.s32.totalorder %s17, 0
    %p112 = por %p110, %p111
    %s113 = ssub.s32 %s18, %s30
    %p114 = scmp.eq.s32.totalorder %s113, 0
    %s116 = sadd.s32 %s115, 1
    %s117 = scalar_select %p114, %s115, %s116
    %p120 = pneg %p114
    %p121 = scmp.eq.s32.totalorder %s11, 1
    %p122 = por %p120, %p121
    %p123 = scmp.ne.s32.totalorder %s115, %s118
    %p124 = scmp.eq.s32.totalorder %s11, 0
    %p125 = por %p123, %p124
    %p126 = scmp.ne.s32.totalorder %s115, %s118
    %p127 = scmp.eq.s32.totalorder %s16, 1
    %p128 = por %p126, %p127
    %p129 = scmp.ne.s32.totalorder %s118, %s119
    %p130 = scmp.eq.s32.totalorder %s16, 0
    %p131 = por %p129, %p130
    %p132 = scmp.ne.s32.totalorder %s118, %s119
    %p133 = scmp.eq.s32.totalorder %s17, 1
    %p134 = por %p132, %p133
    %p136 = scmp.ne.s32.totalorder %s119, %s135
    %p137 = scmp.eq.s32.totalorder %s17, 0
    %p138 = por %p136, %p137
    %s139 = ssub.s32 %s19, %s26
    %p140 = scmp.eq.s32.totalorder %s139, 0
    %s142 = sadd.s32 %s141, 1
    %s143 = scalar_select %p140, %s141, %s142
    %p146 = pneg %p140
    %p147 = scmp.eq.s32.totalorder %s11, 1
    %p148 = por %p146, %p147
    %p149 = scmp.ne.s32.totalorder %s141, %s144
    %p150 = scmp.eq.s32.totalorder %s11, 0
    %p151 = por %p149, %p150
    %p152 = scmp.ne.s32.totalorder %s141, %s144
    %p153 = scmp.eq.s32.totalorder %s16, 1
    %p154 = por %p152, %p153
    %p155 = scmp.ne.s32.totalorder %s144, %s145
    %p156 = scmp.eq.s32.totalorder %s16, 0
    %p157 = por %p155, %p156
    %p158 = scmp.ne.s32.totalorder %s144, %s145
    %p159 = scmp.eq.s32.totalorder %s17, 1
    %p160 = por %p158, %p159
    %p162 = scmp.ne.s32.totalorder %s145, %s161
    %p163 = scmp.eq.s32.totalorder %s17, 0
    %p164 = por %p162, %p163
    %s165 = ssub.s32 %s18, %s30
    %s166 = ssub.s32 %s19, %s26
    %s167 = sor.u32 %s165, %s166
    %p168 = scmp.eq.s32.totalorder %s167, 0
    %s170 = sadd.s32 %s169, 1
    %s171 = scalar_select %p168, %s169, %s170
    %p174 = pneg %p168
    %p175 = scmp.eq.s32.totalorder %s11, 1
    %p176 = por %p174, %p175
    %p177 = scmp.ne.s32.totalorder %s169, %s172
    %p178 = scmp.eq.s32.totalorder %s11, 0
    %p179 = por %p177, %p178
    %p180 = scmp.ne.s32.totalorder %s169, %s172
    %p181 = scmp.eq.s32.totalorder %s16, 1
    %p182 = por %p180, %p181
    %p183 = scmp.ne.s32.totalorder %s172, %s173
    %p184 = scmp.eq.s32.totalorder %s16, 0
    %p185 = por %p183, %p184
    %p186 = scmp.ne.s32.totalorder %s172, %s173
    %p187 = scmp.eq.s32.totalorder %s17, 1
    %p188 = por %p186, %p187
    %p190 = scmp.ne.s32.totalorder %s173, %s189
    %p191 = scmp.eq.s32.totalorder %s17, 0
    %p192 = por %p190, %p191
    %p193 = scmp.le.s32.totalorder 1, %s11
    %p194 = scmp.lt.s32.totalorder %s11, 3
    %p195 = pnand %p193, %p194
    %p196 = pneg %p195
    // Predicated region
    $region9: #{detection_loss.1} parent=5 // pred_check
      _
    $region10: #{detection_loss.1} parent=5 // pred_check_branch
      %198 = sbr.rel (%p195) target = $region12
    $region11: #{detection_loss.1} parent=5 // pred_region
      %s199 = ssub.s32 %s11, 1
      // Predicated region
      $region13: #{detection_loss.1} parent=11 // pred_check
        %p200 = pneg %p157
      $region14: #{detection_loss.1} parent=11 // pred_check_branch
        %202 = sbr.rel (%p200) target = $region16
      $region15: #{detection_loss.1} parent=11 // pred_region
        %s203 = smul.u32 2, %s21
        %p204 = scmp.lt.s32.totalorder %s203, 1
        %s205 = scalar_select %p204, %s203, 1
        %s206 = smul.addr %s205, 4
        %s207 = scalar_lea.vmem %s4, %s206
        %s208 = smul.u32 2, %s21
      $region16: #{detection_loss.1} parent=11 // pred_fallthru
        _
    $region12: #{detection_loss.1} parent=5 // pred_fallthru
      _
    %p209 = scmp.lt.s32.totalorder %s11, 2
    // Predicated region
    $region17: #{detection_loss.1} parent=5 // pred_check
      %p210 = pneg %p209
    $region18: #{detection_loss.1} parent=5 // pred_check_branch
      %212 = sbr.rel (%p210) target = $region20
    $region19: #{detection_loss.1} parent=5 // pred_region
      // Predicated region
      $region21: #{detection_loss.1} parent=19 // pred_check
        %p213 = pneg %p45
      $region22: #{detection_loss.1} parent=19 // pred_check_branch
        %215 = sbr.rel (%p213) target = $region24
      $region23: #{detection_loss.1} parent=19 // pred_region
        %s216 = smul.u32 32, %s19
        %p217 = scmp.lt.s32.totalorder %s18, 1
        %s218 = scalar_select %p217, %s18, 1
        %p219 = scmp.lt.s32.totalorder %s216, 31
        %s220 = scalar_select %p219, %s216, 31
        %s221 = smul.addr %s218, 32
        %s222 = sadd.s32 %s220, %s221
        %s223 = smul.addr %s222, 4
        %s224 = scalar_lea.vmem %s0, %s223
        %s225 = smul.u32 32, %s19
      $region24: #{detection_loss.1} parent=19 // pred_fallthru
        _
      // Predicated region
      $region25: #{detection_loss.1} parent=19 // pred_check
        %p226 = pneg %p73
      $region26: #{detection_loss.1} parent=19 // pred_check_branch
        %228 = sbr.rel (%p226) target = $region28
      $region27: #{detection_loss.1} parent=19 // pred_region
        %s229 = smul.u32 32, %s19
        %p230 = scmp.lt.s32.totalorder %s18, 1
        %s231 = scalar_select %p230, %s18, 1
        %p232 = scmp.lt.s32.totalorder %s229, 31
        %s233 = scalar_select %p232, %s229, 31
        %s234 = smul.addr %s231, 32
        %s235 = sadd.s32 %s233, %s234
        %s236 = smul.addr %s235, 4
        %s237 = scalar_lea.vmem %s1, %s236
        %s238 = smul.u32 32, %s19
      $region28: #{detection_loss.1} parent=19 // pred_fallthru
        _
      // Predicated region
      $region29: #{detection_loss.1} parent=19 // pred_check
        %p239 = pneg %p99
      $region30: #{detection_loss.1} parent=19 // pred_check_branch
        %241 = sbr.rel (%p239) target = $region32
      $region31: #{detection_loss.1} parent=19 // pred_region
        %p242 = scmp.lt.s32.totalorder %s18, 1
        %s243 = scalar_select %p242, %s18, 1
        %s244 = smul.addr %s243, 8
        %s245 = scalar_lea.vmem %s2, %s244
      $region32: #{detection_loss.1} parent=19 // pred_fallthru
        _
      // Predicated region
      $region33: #{detection_loss.1} parent=19 // pred_check
        %p246 = pneg %p125
      $region34: #{detection_loss.1} parent=19 // pred_check_branch
        %248 = sbr.rel (%p246) target = $region36
      $region35: #{detection_loss.1} parent=19 // pred_region
        %p249 = scmp.lt.s32.totalorder %s18, 1
        %s250 = scalar_select %p249, %s18, 1
        %s251 = smul.addr %s250, 8
        %s252 = scalar_lea.vmem %s3, %s251
      $region36: #{detection_loss.1} parent=19 // pred_fallthru
        _
    $region20: #{detection_loss.1} parent=5 // pred_fallthru
      _
    %p253 = scmp.le.s32.totalorder 1, %s11
    %p254 = scmp.lt.s32.totalorder %s11, 3
    %p255 = pnand %p253, %p254
    %p256 = pneg %p255
    // Predicated region
    $region37: #{detection_loss.1} parent=5 // pred_check
      _
    $region38: #{detection_loss.1} parent=5 // pred_check_branch
      %258 = sbr.rel (%p255) target = $region40
    $region39: #{detection_loss.1} parent=5 // pred_region
      %s259 = ssub.s32 %s11, 1
      %s260 = smul.u32 32, %s21
      %p261 = scmp.lt.s32.totalorder %s20, 1
      %s262 = scalar_select %p261, %s20, 1
      %p263 = scmp.lt.s32.totalorder %s260, 31
      %s264 = scalar_select %p263, %s260, 31
      %s265 = smul.addr %s262, 32
      %s266 = sadd.s32 %s264, %s265
      %s267 = smul.addr %s266, 4
      %s268 = scalar_lea.vmem %s0, %s267
      %p269 = pneg %p51
      %p270 = pneg %p48
      %s271 = smul.u32 32, %s21
      %p272 = scmp.lt.s32.totalorder %s20, 1
      %s273 = scalar_select %p272, %s20, 1
      %p274 = scmp.lt.s32.totalorder %s271, 31
      %s275 = scalar_select %p274, %s271, 31
      %s276 = smul.addr %s273, 32
      %s277 = sadd.s32 %s275, %s276
      %s278 = smul.addr %s277, 4
      %s279 = scalar_lea.vmem %s1, %s278
      %p280 = pneg %p79
      %p281 = pneg %p76
      %p282 = scmp.lt.s32.totalorder %s20, 1
      %s283 = scalar_select %p282, %s20, 1
      %s284 = smul.addr %s283, 8
      %s285 = scalar_lea.vmem %s2, %s284
      %p286 = pneg %p105
      %p287 = pneg %p102
      %p288 = scmp.lt.s32.totalorder %s20, 1
      %s289 = scalar_select %p288, %s20, 1
      %s290 = smul.addr %s289, 8
      %s291 = scalar_lea.vmem %s3, %s290
      %p292 = pneg %p131
      %p293 = pneg %p128
      %s294 = smul.u32 2, %s21
      %p295 = scmp.lt.s32.totalorder %s294, 1
      %s296 = scalar_select %p295, %s294, 1
      %s297 = smul.addr %s296, 4
      %s298 = scalar_lea.vmem %s4, %s297
      %p299 = pneg %p157
      %p300 = pneg %p154
      %p301 = pneg %p185
      %p302 = pneg %p182
      %s303 = smul.u32 2, %s21
      %p304 = scmp.lt.s32.totalorder %s20, 1
      %s305 = scalar_select %p304, %s20, 1
      %p306 = scmp.lt.s32.totalorder %s303, 1
      %s307 = scalar_select %p306, %s303, 1
      %s308 = smul.addr %s305, 2
      %s309 = sadd.s32 %s307, %s308
      %s310 = smul.addr %s309, 4
      %s311 = scalar_lea.vmem %s5, %s310
      %s312 = smul.u32 32, %s21
      %p313 = scmp.lt.s32.totalorder %s20, 1
      %s314 = scalar_select %p313, %s20, 1
      %p315 = scmp.lt.s32.totalorder %s312, 31
      %s316 = scalar_select %p315, %s312, 31
      %s317 = smul.addr %s314, 32
      %s318 = sadd.s32 %s316, %s317
      %s319 = smul.addr %s318, 4
      %s320 = scalar_lea.vmem %s0, %s319
      %s321 = smul.u32 32, %s21
      %s322 = smul.u32 32, %s21
      %p323 = scmp.lt.s32.totalorder %s20, 1
      %s324 = scalar_select %p323, %s20, 1
      %p325 = scmp.lt.s32.totalorder %s322, 31
      %s326 = scalar_select %p325, %s322, 31
      %s327 = smul.addr %s324, 32
      %s328 = sadd.s32 %s326, %s327
      %s329 = smul.addr %s328, 4
      %s330 = scalar_lea.vmem %s1, %s329
      %s331 = smul.u32 32, %s21
      %p332 = scmp.lt.s32.totalorder %s20, 1
      %s333 = scalar_select %p332, %s20, 1
      %s334 = smul.addr %s333, 8
      %s335 = scalar_lea.vmem %s2, %s334
      %p336 = scmp.lt.s32.totalorder %s20, 1
      %s337 = scalar_select %p336, %s20, 1
      %s338 = smul.addr %s337, 8
      %s339 = scalar_lea.vmem %s3, %s338
      %s340 = smul.u32 2, %s21
      %p341 = scmp.lt.s32.totalorder %s340, 1
      %s342 = scalar_select %p341, %s340, 1
      %s343 = smul.addr %s342, 4
      %s344 = scalar_lea.vmem %s4, %s343
      %s345 = smul.u32 2, %s21
      %s346 = smul.u32 2, %s21
      %p347 = scmp.lt.s32.totalorder %s20, 1
      %s348 = scalar_select %p347, %s20, 1
      %p349 = scmp.lt.s32.totalorder %s346, 1
      %s350 = scalar_select %p349, %s346, 1
      %s351 = smul.addr %s348, 2
      %s352 = sadd.s32 %s350, %s351
      %s353 = smul.addr %s352, 4
      %s354 = scalar_lea.vmem %s5, %s353
      %s355 = smul.u32 2, %s21
      %v357 = vld [vmem:[%s320] sm:$0xf]
      %v358 = vld [vmem:[%s320 + $0x4] sm:$0xf]
      %v359 = vld [vmem:[%s320 + $0x8] sm:$0xf]
      %v360 = vld [vmem:[%s320 + $0xc] sm:$0xf]
      %v361 = vld [vmem:[%s320 + $0x10] sm:$0xf]
      %v362 = vld [vmem:[%s320 + $0x14] sm:$0xf]
      %v363 = vld [vmem:[%s320 + $0x18] sm:$0xf]
      %v364 = vld [vmem:[%s320 + $0x1c] sm:$0xf]
      %v365 = vld [vmem:[%s320 + $0x20] sm:$0xf]
      %v366 = vld [vmem:[%s320 + $0x24] sm:$0xf]
      %v367 = vld [vmem:[%s320 + $0x28] sm:$0xf]
      %v368 = vld [vmem:[%s320 + $0x2c] sm:$0xf]
      %v369 = vld [vmem:[%s320 + $0x30] sm:$0xf]
      %v370 = vld [vmem:[%s320 + $0x34] sm:$0xf]
      %v371 = vld [vmem:[%s320 + $0x38] sm:$0xf]
      %v372 = vld [vmem:[%s320 + $0x3c] sm:$0xf]
      %v373 = vld [vmem:[%s320 + $0x40] sm:$0xf]
      %v374 = vld [vmem:[%s320 + $0x44] sm:$0xf]
      %v375 = vld [vmem:[%s320 + $0x48] sm:$0xf]
      %v376 = vld [vmem:[%s320 + $0x4c] sm:$0xf]
      %v377 = vld [vmem:[%s320 + $0x50] sm:$0xf]
      %v378 = vld [vmem:[%s320 + $0x54] sm:$0xf]
      %v379 = vld [vmem:[%s320 + $0x58] sm:$0xf]
      %v380 = vld [vmem:[%s320 + $0x5c] sm:$0xf]
      %v381 = vld [vmem:[%s320 + $0x60] sm:$0xf]
      %v382 = vld [vmem:[%s320 + $0x64] sm:$0xf]
      %v383 = vld [vmem:[%s320 + $0x68] sm:$0xf]
      %v384 = vld [vmem:[%s320 + $0x6c] sm:$0xf]
      %v385 = vld [vmem:[%s320 + $0x70] sm:$0xf]
      %v386 = vld [vmem:[%s320 + $0x74] sm:$0xf]
      %v387 = vld [vmem:[%s320 + $0x78] sm:$0xf]
      %v388 = vld [vmem:[%s320 + $0x7c] sm:$0xf]
      %v389 = vld [vmem:[%s330] sm:$0xf]
      %v390 = vld [vmem:[%s330 + $0x4] sm:$0xf]
      %v391 = vld [vmem:[%s330 + $0x8] sm:$0xf]
      %v392 = vld [vmem:[%s330 + $0xc] sm:$0xf]
      %v393 = vld [vmem:[%s330 + $0x10] sm:$0xf]
      %v394 = vld [vmem:[%s330 + $0x14] sm:$0xf]
      %v395 = vld [vmem:[%s330 + $0x18] sm:$0xf]
      %v396 = vld [vmem:[%s330 + $0x1c] sm:$0xf]
      %v397 = vld [vmem:[%s330 + $0x20] sm:$0xf]
      %v398 = vld [vmem:[%s330 + $0x24] sm:$0xf]
      %v399 = vld [vmem:[%s330 + $0x28] sm:$0xf]
      %v400 = vld [vmem:[%s330 + $0x2c] sm:$0xf]
      %v401 = vld [vmem:[%s330 + $0x30] sm:$0xf]
      %v402 = vld [vmem:[%s330 + $0x34] sm:$0xf]
      %v403 = vld [vmem:[%s330 + $0x38] sm:$0xf]
      %v404 = vld [vmem:[%s330 + $0x3c] sm:$0xf]
      %v405 = vld [vmem:[%s330 + $0x40] sm:$0xf]
      %v406 = vld [vmem:[%s330 + $0x44] sm:$0xf]
      %v407 = vld [vmem:[%s330 + $0x48] sm:$0xf]
      %v408 = vld [vmem:[%s330 + $0x4c] sm:$0xf]
      %v409 = vld [vmem:[%s330 + $0x50] sm:$0xf]
      %v410 = vld [vmem:[%s330 + $0x54] sm:$0xf]
      %v411 = vld [vmem:[%s330 + $0x58] sm:$0xf]
      %v412 = vld [vmem:[%s330 + $0x5c] sm:$0xf]
      %v413 = vld [vmem:[%s330 + $0x60] sm:$0xf]
      %v414 = vld [vmem:[%s330 + $0x64] sm:$0xf]
      %v415 = vld [vmem:[%s330 + $0x68] sm:$0xf]
      %v416 = vld [vmem:[%s330 + $0x6c] sm:$0xf]
      %v417 = vld [vmem:[%s330 + $0x70] sm:$0xf]
      %v418 = vld [vmem:[%s330 + $0x74] sm:$0xf]
      %v419 = vld [vmem:[%s330 + $0x78] sm:$0xf]
      %v420 = vld [vmem:[%s330 + $0x7c] sm:$0xf]
      %v421 = vld [vmem:[%s335] sm:$0xff]
      %v422 = vld [vmem:[%s339] sm:$0xff]
      %v423 = vld [vmem:[%s344] sm:$0xff]
      %v424 = vlaneseq
      %v425 = vand.u32 %v424, 127
      %v426 = vadd.s32 %v425, 128
      %s427 = smul.u32 %s21, 256
      %v428 = vstv %s427
      %v429 = vadd.s32 %v428, %v425
      %v430 = vadd.s32 %v428, %v426
      %vm431 = vcmp.lt.s32.totalorder %v429, 256
      %vm432 = vcmp.lt.s32.totalorder %v430, 256
      %v433 = vlaneseq
      %v434 = vshrl.u32 %v433, 7
      %v435 = vadd.s32 %v434, 8
      %v436 = vadd.s32 %v434, 16
      %vm437 = vcmp.eq.s32.totalorder %v434, %v425
      %vm438 = vcmp.eq.s32.totalorder %v435, %v425
      %vm439 = vcmp.eq.s32.totalorder %v436, %v425
      %v440 = vsel %vm437, 1, 0
      %v441 = vsel %vm438, 1, 0
      %v442 = vsel %vm439, 1, 0
      %v443 = vcvt.s32.f32 %v440
      %v444 = vcvt.s32.f32 %v441
      %v445 = vcvt.s32.f32 %v442
      %v446 = vpack.c.bf16 %v444, %v443
      %v447 = vpack.c.bf16 %v445, %v445
      %v480 = vunpack.c.l.b16 %v357
      %v481 = vunpack.c.l.b16 %v358
      %v482 = vunpack.c.l.b16 %v359
      %v483 = vunpack.c.l.b16 %v360
      %v484 = vunpack.c.l.b16 %v361
      %v485 = vunpack.c.l.b16 %v362
      %v486 = vunpack.c.l.b16 %v363
      %v487 = vunpack.c.l.b16 %v364
      %v488 = vunpack.c.l.b16 %v365
      %v489 = vunpack.c.l.b16 %v366
      %v490 = vunpack.c.l.b16 %v367
      %v491 = vunpack.c.l.b16 %v368
      %v492 = vunpack.c.l.b16 %v369
      %v493 = vunpack.c.l.b16 %v370
      %v494 = vunpack.c.l.b16 %v371
      %v495 = vunpack.c.l.b16 %v372
      %v496 = vunpack.c.l.b16 %v373
      %v497 = vunpack.c.l.b16 %v374
      %v498 = vunpack.c.l.b16 %v375
      %v499 = vunpack.c.l.b16 %v376
      %v500 = vunpack.c.l.b16 %v377
      %v501 = vunpack.c.l.b16 %v378
      %v502 = vunpack.c.l.b16 %v379
      %v503 = vunpack.c.l.b16 %v380
      %v504 = vunpack.c.l.b16 %v381
      %v505 = vunpack.c.l.b16 %v382
      %v506 = vunpack.c.l.b16 %v383
      %v507 = vunpack.c.l.b16 %v384
      %v508 = vunpack.c.l.b16 %v385
      %v509 = vunpack.c.l.b16 %v386
      %v510 = vunpack.c.l.b16 %v387
      %v511 = vunpack.c.l.b16 %v388
      %v512 = vpack.c.b16 %v481, %v480
      %v513 = vpack.c.b16 %v483, %v482
      %v514 = vpack.c.b16 %v485, %v484
      %v515 = vpack.c.b16 %v487, %v486
      %v516 = vpack.c.b16 %v489, %v488
      %v517 = vpack.c.b16 %v491, %v490
      %v518 = vpack.c.b16 %v493, %v492
      %v519 = vpack.c.b16 %v495, %v494
      %v520 = vpack.c.b16 %v497, %v496
      %v521 = vpack.c.b16 %v499, %v498
      %v522 = vpack.c.b16 %v501, %v500
      %v523 = vpack.c.b16 %v503, %v502
      %v524 = vpack.c.b16 %v505, %v504
      %v525 = vpack.c.b16 %v507, %v506
      %v526 = vpack.c.b16 %v509, %v508
      %v527 = vpack.c.b16 %v511, %v510
      %vm528 = vcmask 171008
      %v530 = vsel %vm528, %v446, 0
      %v533 = vsel %vm528, %v447, 0
      %v536 = vsel %vm528, %v512, 0
      %v539 = vsel %vm528, %v513, 0
      %v542 = vsel %vm528, %v514, 0
      %v545 = vsel %vm528, %v515, 0
      %v548 = vsel %vm528, %v516, 0
      %v551 = vsel %vm528, %v517, 0
      %v554 = vsel %vm528, %v518, 0
      %v557 = vsel %vm528, %v519, 0
      %v560 = vsel %vm528, %v520, 0
      %v563 = vsel %vm528, %v521, 0
      %v566 = vsel %vm528, %v522, 0
      %v569 = vsel %vm528, %v523, 0
      %v572 = vsel %vm528, %v524, 0
      %v575 = vsel %vm528, %v525, 0
      %v578 = vsel %vm528, %v526, 0
      %v581 = vsel %vm528, %v527, 0
      %583 = vmatprep.subr.bf16.mxu0 0
      %584 = vmatpush1.bf16.xpose.msra.mxu0 %v557
      %585 = vmatprep.subr.bf16.mxu0 0
      %586 = vmatpush1.bf16.xpose.msra.mxu0 %v554
      %587 = vmatprep.subr.bf16.mxu0 0
      %588 = vmatpush1.bf16.xpose.msra.mxu0 %v551
      %589 = vmatprep.subr.bf16.mxu0 0
      %590 = vmatpush1.bf16.xpose.msra.mxu0 %v548
      %591 = vmatprep.subr.bf16.mxu0 0
      %592 = vmatpush1.bf16.xpose.msra.mxu0 %v545
      %593 = vmatprep.subr.bf16.mxu0 0
      %594 = vmatpush1.bf16.xpose.msra.mxu0 %v542
      %595 = vmatprep.subr.bf16.mxu0 0
      %596 = vmatpush1.bf16.xpose.msra.mxu0 %v539
      %597 = vmatprep.subr.bf16.mxu0 0
      %598 = vmatpush1.bf16.xpose.msra.mxu0 %v536
      %599 = vmatprep.subr.bf16.mxu0 0
      %600 = vmatpush2.bf16.xpose.msra.mxu0 %v581
      %601 = vmatprep.subr.bf16.mxu0 0
      %602 = vmatpush2.bf16.xpose.msra.mxu0 %v578
      %603 = vmatprep.subr.bf16.mxu0 0
      %604 = vmatpush2.bf16.xpose.msra.mxu0 %v575
      %605 = vmatprep.subr.bf16.mxu0 0
      %606 = vmatpush2.bf16.xpose.msra.mxu0 %v572
      %607 = vmatprep.subr.bf16.mxu0 0
      %608 = vmatpush2.bf16.xpose.msra.mxu0 %v569
      %609 = vmatprep.subr.bf16.mxu0 0
      %610 = vmatpush2.bf16.xpose.msra.mxu0 %v566
      %611 = vmatprep.subr.bf16.mxu0 0
      %612 = vmatpush2.bf16.xpose.msra.mxu0 %v563
      %613 = vmatprep.subr.bf16.mxu0 0
      %614 = vmatpush2.bf16.xpose.msra.mxu0 %v560
      %615 = vmatprep.mubr.bf16.mxu0 0
      %616 = vmatmul.mubr.bf16.gmra.mxu0 %v530
      %v617 = vpop.f32.mrf.mxu0
      %v618 = vadd.f32 0.0, %v617
      %v619 = vpop.f32.mrf.mxu0
      %v620 = vadd.f32 0.0, %v619
      %v621 = vpop.f32.mrf.mxu0
      %v622 = vadd.f32 0.0, %v621
      %v623 = vpop.f32.mrf.mxu0
      %v624 = vadd.f32 0.0, %v623
      %625 = vmatprep.mubr.bf16.mxu0 0
      %626 = vmatmul.mubr.bf16.gmra.mxu0 %v533
      %v627 = vpop.f32.mrf.mxu0
      %v628 = vadd.f32 0.0, %v627
      %v629 = vpop.f32.mrf.mxu0
      %v630 = vadd.f32 0.0, %v629
      %v631 = vpop.f32.mrf.mxu0
      %v632 = vpop.f32.mrf.mxu0
      %633 = vdwg.mxu0
      %v634 = vpack.c.bf16 %v443, %v443
      %v667 = vunpack.c.l.b16 %v389
      %v668 = vunpack.c.l.b16 %v390
      %v669 = vunpack.c.l.b16 %v391
      %v670 = vunpack.c.l.b16 %v392
      %v671 = vunpack.c.l.b16 %v393
      %v672 = vunpack.c.l.b16 %v394
      %v673 = vunpack.c.l.b16 %v395
      %v674 = vunpack.c.l.b16 %v396
      %v675 = vunpack.c.l.b16 %v397
      %v676 = vunpack.c.l.b16 %v398
      %v677 = vunpack.c.l.b16 %v399
      %v678 = vunpack.c.l.b16 %v400
      %v679 = vunpack.c.l.b16 %v401
      %v680 = vunpack.c.l.b16 %v402
      %v681 = vunpack.c.l.b16 %v403
      %v682 = vunpack.c.l.b16 %v404
      %v683 = vunpack.c.l.b16 %v405
      %v684 = vunpack.c.l.b16 %v406
      %v685 = vunpack.c.l.b16 %v407
      %v686 = vunpack.c.l.b16 %v408
      %v687 = vunpack.c.l.b16 %v409
      %v688 = vunpack.c.l.b16 %v410
      %v689 = vunpack.c.l.b16 %v411
      %v690 = vunpack.c.l.b16 %v412
      %v691 = vunpack.c.l.b16 %v413
      %v692 = vunpack.c.l.b16 %v414
      %v693 = vunpack.c.l.b16 %v415
      %v694 = vunpack.c.l.b16 %v416
      %v695 = vunpack.c.l.b16 %v417
      %v696 = vunpack.c.l.b16 %v418
      %v697 = vunpack.c.l.b16 %v419
      %v698 = vunpack.c.l.b16 %v420
      %v699 = vpack.c.b16 %v668, %v667
      %v700 = vpack.c.b16 %v670, %v669
      %v701 = vpack.c.b16 %v672, %v671
      %v702 = vpack.c.b16 %v674, %v673
      %v703 = vpack.c.b16 %v676, %v675
      %v704 = vpack.c.b16 %v678, %v677
      %v705 = vpack.c.b16 %v680, %v679
      %v706 = vpack.c.b16 %v682, %v681
      %v707 = vpack.c.b16 %v684, %v683
      %v708 = vpack.c.b16 %v686, %v685
      %v709 = vpack.c.b16 %v688, %v687
      %v710 = vpack.c.b16 %v690, %v689
      %v711 = vpack.c.b16 %v692, %v691
      %v712 = vpack.c.b16 %v694, %v693
      %v713 = vpack.c.b16 %v696, %v695
      %v714 = vpack.c.b16 %v698, %v697
      %vm715 = vcmask 31744
      %v717 = vsel %vm715, %v634, 0
      %v720 = vsel %vm715, %v699, 0
      %v723 = vsel %vm715, %v700, 0
      %v726 = vsel %vm715, %v701, 0
      %v729 = vsel %vm715, %v702, 0
      %v732 = vsel %vm715, %v703, 0
      %v735 = vsel %vm715, %v704, 0
      %v738 = vsel %vm715, %v705, 0
      %v741 = vsel %vm715, %v706, 0
      %v744 = vsel %vm715, %v707, 0
      %v747 = vsel %vm715, %v708, 0
      %v750 = vsel %vm715, %v709, 0
      %v753 = vsel %vm715, %v710, 0
      %v756 = vsel %vm715, %v711, 0
      %v759 = vsel %vm715, %v712, 0
      %v762 = vsel %vm715, %v713, 0
      %v765 = vsel %vm715, %v714, 0
      %767 = vmatprep.subr.bf16.mxu0 0
      %768 = vmatpush1.bf16.xpose.msra.mxu0 %v741
      %769 = vmatprep.subr.bf16.mxu0 0
      %770 = vmatpush1.bf16.xpose.msra.mxu0 %v738
      %771 = vmatprep.subr.bf16.mxu0 0
      %772 = vmatpush1.bf16.xpose.msra.mxu0 %v735
      %773 = vmatprep.subr.bf16.mxu0 0
      %774 = vmatpush1.bf16.xpose.msra.mxu0 %v732
      %775 = vmatprep.subr.bf16.mxu0 0
      %776 = vmatpush1.bf16.xpose.msra.mxu0 %v729
      %777 = vmatprep.subr.bf16.mxu0 0
      %778 = vmatpush1.bf16.xpose.msra.mxu0 %v726
      %779 = vmatprep.subr.bf16.mxu0 0
      %780 = vmatpush1.bf16.xpose.msra.mxu0 %v723
      %781 = vmatprep.subr.bf16.mxu0 0
      %782 = vmatpush1.bf16.xpose.msra.mxu0 %v720
      %783 = vmatprep.subr.bf16.mxu0 0
      %784 = vmatpush2.bf16.xpose.msra.mxu0 %v765
      %785 = vmatprep.subr.bf16.mxu0 0
      %786 = vmatpush2.bf16.xpose.msra.mxu0 %v762
      %787 = vmatprep.subr.bf16.mxu0 0
      %788 = vmatpush2.bf16.xpose.msra.mxu0 %v759
      %789 = vmatprep.subr.bf16.mxu0 0
      %790 = vmatpush2.bf16.xpose.msra.mxu0 %v756
      %791 = vmatprep.subr.bf16.mxu0 0
      %792 = vmatpush2.bf16.xpose.msra.mxu0 %v753
      %793 = vmatprep.subr.bf16.mxu0 0
      %794 = vmatpush2.bf16.xpose.msra.mxu0 %v750
      %795 = vmatprep.subr.bf16.mxu0 0
      %796 = vmatpush2.bf16.xpose.msra.mxu0 %v747
      %797 = vmatprep.subr.bf16.mxu0 0
      %798 = vmatpush2.bf16.xpose.msra.mxu0 %v744
      %799 = vmatprep.mubr.bf16.mxu0 0
      %800 = vmatmul.mubr.bf16.gmra.mxu0 %v717
      %v801 = vpop.f32.mrf.mxu0
      %v802 = vadd.f32 0.0, %v801
      %v803 = vpop.f32.mrf.mxu0
      %v804 = vadd.f32 0.0, %v803
      %v805 = vpop.f32.mrf.mxu0
      %v806 = vpop.f32.mrf.mxu0
      %807 = vdwg.mxu0
      %809 = vset.pattern.permute.xlu0 2
      %810 = vperm.xlu0 %809, %v421
      %v811 = vpop.permute.xlu0 %810
      %v814 = vlaneseq
      %v815 = vshrl.u32 %v814, 7
      %v816 = vsub.s32 2, %v815
      %v817 = vrot.slane %v423, %v816
      %v818 = vlaneseq
      %v819 = vshrl.u32 %v818, 7
      %v820 = vsub.s32 6, %v819
      %v821 = vrot.slane %v423, %v820
      %v824 = vlaneseq
      %v825 = vshrl.u32 %v824, 7
      %v826 = vsub.s32 2, %v825
      %v827 = vrot.slane %v817, %v826
      %v828 = vlaneseq
      %v829 = vshrl.u32 %v828, 7
      %v830 = vsub.s32 2, %v829
      %v831 = vrot.slane %v821, %v830
      %v832 = vmin.f32 %v811, %v827
      %v833 = vmin.f32 %v811, %v831
      %834 = vset.pattern.permute.xlu0 0
      %835 = vperm.xlu0 %834, %v421
      %v836 = vpop.permute.xlu0 %835
      %v838 = vlaneseq
      %v839 = vshrl.u32 %v838, 7
      %v840 = vsub.s32 0, %v839
      %v841 = vrot.slane %v423, %v840
      %v842 = vlaneseq
      %v843 = vshrl.u32 %v842, 7
      %v844 = vsub.s32 4, %v843
      %v845 = vrot.slane %v423, %v844
      %v848 = vlaneseq
      %v849 = vshrl.u32 %v848, 7
      %v850 = vsub.s32 0, %v849
      %v851 = vrot.slane %v841, %v850
      %v852 = vlaneseq
      %v853 = vshrl.u32 %v852, 7
      %v854 = vsub.s32 0, %v853
      %v855 = vrot.slane %v845, %v854
      %v856 = vmax.f32 %v836, %v851
      %v857 = vmax.f32 %v836, %v855
      %v858 = vsub.f32 %v832, %v856
      %v859 = vsub.f32 %v833, %v857
      %v860 = vmax.f32 %v858, 0.0
      %v861 = vmax.f32 %v859, 0.0
      %862 = vset.pattern.permute.xlu0 3
      %863 = vperm.xlu0 %862, %v421
      %v864 = vpop.permute.xlu0 %863
      %v866 = vlaneseq
      %v867 = vshrl.u32 %v866, 7
      %v868 = vsub.s32 3, %v867
      %v869 = vrot.slane %v423, %v868
      %v870 = vlaneseq
      %v871 = vshrl.u32 %v870, 7
      %v872 = vsub.s32 7, %v871
      %v873 = vrot.slane %v423, %v872
      %v876 = vlaneseq
      %v877 = vshrl.u32 %v876, 7
      %v878 = vsub.s32 3, %v877
      %v879 = vrot.slane %v869, %v878
      %v880 = vlaneseq
      %v881 = vshrl.u32 %v880, 7
      %v882 = vsub.s32 3, %v881
      %v883 = vrot.slane %v873, %v882
      %v884 = vmin.f32 %v864, %v879
      %v885 = vmin.f32 %v864, %v883
      %886 = vset.pattern.permute.xlu0 1
      %887 = vperm.xlu0 %886, %v421
      %v888 = vpop.permute.xlu0 %887
      %v890 = vlaneseq
      %v891 = vshrl.u32 %v890, 7
      %v892 = vsub.s32 1, %v891
      %v893 = vrot.slane %v423, %v892
      %v894 = vlaneseq
      %v895 = vshrl.u32 %v894, 7
      %v896 = vsub.s32 5, %v895
      %v897 = vrot.slane %v423, %v896
      %v900 = vlaneseq
      %v901 = vshrl.u32 %v900, 7
      %v902 = vsub.s32 1, %v901
      %v903 = vrot.slane %v893, %v902
      %v904 = vlaneseq
      %v905 = vshrl.u32 %v904, 7
      %v906 = vsub.s32 1, %v905
      %v907 = vrot.slane %v897, %v906
      %v908 = vmax.f32 %v888, %v903
      %v909 = vmax.f32 %v888, %v907
      %v910 = vsub.f32 %v884, %v908
      %v911 = vsub.f32 %v885, %v909
      %v912 = vmax.f32 %v910, 0.0
      %v913 = vmax.f32 %v911, 0.0
      %v914 = vmul.f32 %v860, %v912
      %v915 = vmul.f32 %v861, %v913
      %916 = vrot.lane.b32.xlu0 %v421, 2
      %v917 = vpop.permute.xlu0 %916
      %v919 = vsub.f32 %v421, %v917
      %921 = vrot.lane.b32.xlu0 %v919, 127
      %v922 = vpop.permute.xlu0 %921
      %v924 = vmul.f32 %v919, %v922
      %v925 = vrot.slane %v423, 6
      %v927 = vsub.f32 %v423, %v925
      %v929 = vrot.slane %v927, 5
      %v930 = vrot.slane %v929, 4
      %v932 = vmul.f32 %v927, %v930
      %934 = vset.pattern.permute.xlu0 2
      %935 = vperm.xlu0 %934, %v924
      %v936 = vpop.permute.xlu0 %935
      %v939 = vlaneseq
      %v940 = vshrl.u32 %v939, 7
      %v941 = vsub.s32 2, %v940
      %v942 = vrot.slane %v932, %v941
      %v943 = vlaneseq
      %v944 = vshrl.u32 %v943, 7
      %v945 = vsub.s32 6, %v944
      %v946 = vrot.slane %v932, %v945
      %v949 = vlaneseq
      %v950 = vshrl.u32 %v949, 7
      %v951 = vsub.s32 2, %v950
      %v952 = vrot.slane %v942, %v951
      %v953 = vlaneseq
      %v954 = vshrl.u32 %v953, 7
      %v955 = vsub.s32 2, %v954
      %v956 = vrot.slane %v946, %v955
      %v957 = vadd.f32 %v936, %v952
      %v958 = vadd.f32 %v936, %v956
      %v959 = vsub.f32 %v957, %v914
      %v960 = vsub.f32 %v958, %v915
      %v961 = vmax.f32 %v959, 1e-10
      %v962 = vmax.f32 %v960, 1e-10
      %v963 = vrcp.pop %v961
      %v964 = vmul.f32 %v914, %v963
      %v965 = vrcp.pop %v962
      %v966 = vmul.f32 %v915, %v965
      %vm967 = vcmp.gt.f32.partialorder %v421, 0.0
      %v968 = vsel %vm967, 1, 0
      %969 = vset.pattern.permute.xlu0 5
      %970 = vperm.xlu0 %969, %v968
      %v971 = vpop.permute.xlu0 %970
      %vm972 = vcmp.eq.s32.totalorder %v971, 1
      %v973 = vsel %vm972, %v964, -1.0
      %v974 = vsel %vm972, %v966, -1.0
      %v975 = vrot.slane %v973, 4
      %v976 = vmax.f32 %v973, %v975
      %v977 = vrot.slane %v976, 2
      %v978 = vmax.f32 %v976, %v977
      %v979 = vrot.slane %v978, 1
      %v980 = vmax.f32 %v978, %v979
      %v981 = vrot.slane %v974, 4
      %v982 = vmax.f32 %v974, %v981
      %v983 = vrot.slane %v982, 2
      %v984 = vmax.f32 %v982, %v983
      %v985 = vrot.slane %v984, 1
      %v986 = vmax.f32 %v984, %v985
      %vm987 = vcmp.eq.f32.partialorder %v973, %v980
      %vm988 = vcmp.eq.f32.partialorder %v974, %v986
      %v989 = vsel %vm987, %v434, 8
      %v990 = vsel %vm988, %v434, 8
      %v991 = vrot.slane %v989, 4
      %vm992 = vcmp.lt.s32.totalorder %v989, %v991
      %v993 = vsel %vm992, %v989, %v991
      %v994 = vrot.slane %v993, 2
      %vm995 = vcmp.lt.s32.totalorder %v993, %v994
      %v996 = vsel %vm995, %v993, %v994
      %v997 = vrot.slane %v996, 1
      %vm998 = vcmp.lt.s32.totalorder %v996, %v997
      %v999 = vsel %vm998, %v996, %v997
      %v1000 = vrot.slane %v990, 4
      %vm1001 = vcmp.lt.s32.totalorder %v990, %v1000
      %v1002 = vsel %vm1001, %v990, %v1000
      %v1003 = vrot.slane %v1002, 2
      %vm1004 = vcmp.lt.s32.totalorder %v1002, %v1003
      %v1005 = vsel %vm1004, %v1002, %v1003
      %v1006 = vrot.slane %v1005, 1
      %vm1007 = vcmp.lt.s32.totalorder %v1005, %v1006
      %v1008 = vsel %vm1007, %v1005, %v1006
      %vm1009 = vcmp.eq.s32.totalorder %v434, %v999
      %vm1010 = vcmp.eq.s32.totalorder %v434, %v1008
      %v1011 = vsel %vm1009, 1, 0
      %v1012 = vsel %vm1010, 1, 0
      %v1013 = vcvt.s32.f32 %v1011
      %v1014 = vcvt.s32.f32 %v1012
      %vm1015 = vcmp.ge.f32.partialorder %v980, 0.5
      %vm1016 = vcmp.ge.f32.partialorder %v986, 0.5
      %vm1017 = vcmp.lt.f32.partialorder %v980, 0.4
      %vm1018 = vcmp.lt.f32.partialorder %v986, 0.4
      %vm1019 = vmxor %vm1015, 1
      %vm1020 = vmxor %vm1016, 1
      %vm1021 = vmand %vm1017, %vm1019
      %vm1022 = vmand %vm1018, %vm1020
      %vm1023 = vmand %vm1015, %vm431
      %vm1024 = vmand %vm1016, %vm432
      %v1025 = vsel %vm1023, 1, 0
      %v1026 = vsel %vm1024, 1, 0
      %v1027 = vcvt.s32.f32 %v1025
      %v1028 = vcvt.s32.f32 %v1026
      %vm1029 = vcmask 64512
      %v1031 = vsel %vm1029, %v422, 0
      %1033 = vmatprep.subr.mxu0 0.0
      %1034 = vmatpush1.msra.mxu0 0.0
      %1035 = vmatprep.subr.mxu0 0.0
      %1036 = vmatpush1.msra.mxu0 0.0
      %1037 = vmatprep.subr.mxu0 0.0
      %1038 = vmatpush1.msra.mxu0 0.0
      %1039 = vmatprep.subr.mxu0 0.0
      %1040 = vmatpush1.msra.mxu0 0.0
      %1041 = vmatprep.subr.mxu0 0.0
      %1042 = vmatpush1.msra.mxu0 0.0
      %1043 = vmatprep.subr.mxu0 0.0
      %1044 = vmatpush1.msra.mxu0 0.0
      %1045 = vmatprep.subr.mxu0 0.0
      %1046 = vmatpush1.msra.mxu0 0.0
      %1047 = vmatprep.subr.mxu0 0.0
      %1048 = vmatpush1.msra.mxu0 0.0
      %1049 = vmatprep.subr.mxu0 0.0
      %1050 = vmatpush1.msra.mxu0 0.0
      %1051 = vmatprep.subr.mxu0 0.0
      %1052 = vmatpush1.msra.mxu0 0.0
      %1053 = vmatprep.subr.mxu0 0.0
      %1054 = vmatpush1.msra.mxu0 0.0
      %1055 = vmatprep.subr.mxu0 0.0
      %1056 = vmatpush1.msra.mxu0 0.0
      %1057 = vmatprep.subr.mxu0 0.0
      %1058 = vmatpush1.msra.mxu0 0.0
      %1059 = vmatprep.subr.mxu0 0.0
      %1060 = vmatpush1.msra.mxu0 0.0
      %1061 = vmatprep.subr.mxu0 0.0
      %1062 = vmatpush1.msra.mxu0 0.0
      %1063 = vmatprep.subr.mxu0 %v1014
      %1064 = vmatpush1.msra.mxu0 %v1013
      %1065 = vmatprep.subr.mxu0 0.0
      %1066 = vmatpush2.msra.mxu0 0.0
      %1067 = vmatprep.subr.mxu0 0.0
      %1068 = vmatpush2.msra.mxu0 0.0
      %1069 = vmatprep.subr.mxu0 0.0
      %1070 = vmatpush2.msra.mxu0 0.0
      %1071 = vmatprep.subr.mxu0 0.0
      %1072 = vmatpush2.msra.mxu0 0.0
      %1073 = vmatprep.subr.mxu0 0.0
      %1074 = vmatpush2.msra.mxu0 0.0
      %1075 = vmatprep.subr.mxu0 0.0
      %1076 = vmatpush2.msra.mxu0 0.0
      %1077 = vmatprep.subr.mxu0 0.0
      %1078 = vmatpush2.msra.mxu0 0.0
      %1079 = vmatprep.subr.mxu0 0.0
      %1080 = vmatpush2.msra.mxu0 0.0
      %1081 = vmatprep.subr.mxu0 0.0
      %1082 = vmatpush2.msra.mxu0 0.0
      %1083 = vmatprep.subr.mxu0 0.0
      %1084 = vmatpush2.msra.mxu0 0.0
      %1085 = vmatprep.subr.mxu0 0.0
      %1086 = vmatpush2.msra.mxu0 0.0
      %1087 = vmatprep.subr.mxu0 0.0
      %1088 = vmatpush2.msra.mxu0 0.0
      %1089 = vmatprep.subr.mxu0 0.0
      %1090 = vmatpush2.msra.mxu0 0.0
      %1091 = vmatprep.subr.mxu0 0.0
      %1092 = vmatpush2.msra.mxu0 0.0
      %1093 = vmatprep.subr.mxu0 0.0
      %1094 = vmatpush2.msra.mxu0 0.0
      %1095 = vmatprep.subr.mxu0 0.0
      %1096 = vmatpush2.msra.mxu0 0.0
      %1097 = vmatprep.mubr.f32.mxu0 0.0
      %1098 = vmatmul.mubr.f32.gmra.mxu0 %v1031
      %v1099 = vpop.f32.mrf.mxu0
      %v1100 = vadd.f32 0.0, %v1099
      %v1101 = vpop.f32.mrf.mxu0
      %v1102 = vadd.f32 0.0, %v1101
      %1103 = vdwg.mxu0
      %v1104 = vadd.f32 %v1100, 1.0
      %v1105 = vadd.f32 %v1102, 1.0
      %v1106 = vsel %vm1015, %v1104, 0.0
      %v1107 = vsel %vm1016, %v1105, 0.0
      %v1108 = vadd.f32 %v1106, 0.5
      %v1109 = vadd.f32 %v1107, 0.5
      %v1110 = vcvt.f32.s32.to.zero.pseudo %v1108
      %v1111 = vcvt.f32.s32.to.zero.pseudo %v1109
      %vm1112 = vcmask 1044480
      %v1113 = vsel %vm1112, %v628, -inf
      %v1114 = vmax.f32 %v618, %v1113
      %v1115 = vmax.f32 %v1114, %v622
      %v1116 = vrot.slane %v1115, 4
      %v1117 = vmax.f32 %v1115, %v1116
      %v1118 = vrot.slane %v1117, 2
      %v1119 = vmax.f32 %v1117, %v1118
      %v1120 = vrot.slane %v1119, 1
      %v1121 = vmax.f32 %v1119, %v1120
      %v1122 = vsel %vm1112, %v630, -inf
      %v1123 = vmax.f32 %v620, %v1122
      %v1124 = vmax.f32 %v1123, %v624
      %v1125 = vrot.slane %v1124, 4
      %v1126 = vmax.f32 %v1124, %v1125
      %v1127 = vrot.slane %v1126, 2
      %v1128 = vmax.f32 %v1126, %v1127
      %v1129 = vrot.slane %v1128, 1
      %v1130 = vmax.f32 %v1128, %v1129
      %v1131 = vsub.f32 %v618, %v1121
      %v1132 = vsub.f32 %v620, %v1130
      %v1133 = vsub.f32 %v622, %v1121
      %v1134 = vsub.f32 %v624, %v1130
      %v1135 = vsub.f32 %v628, %v1121
      %v1136 = vsub.f32 %v630, %v1130
      %v1137 = vmul.f32 %v1131, 1.442695
      %v1138 = vpow.pop %v1137
      %v1139 = vmul.f32 %v1132, 1.442695
      %v1140 = vpow.pop %v1139
      %v1141 = vmul.f32 %v1133, 1.442695
      %v1142 = vpow.pop %v1141
      %v1143 = vmul.f32 %v1134, 1.442695
      %v1144 = vpow.pop %v1143
      %v1145 = vmul.f32 %v1135, 1.442695
      %v1146 = vpow.pop %v1145
      %v1147 = vmul.f32 %v1136, 1.442695
      %v1148 = vpow.pop %v1147
      %v1149 = vadd.f32 %v1138, %v1142
      %v1150 = vsel %vm1112, %v1146, 0.0
      %v1151 = vadd.f32 %v1149, %v1150
      %v1152 = vrot.slane %v1151, 4
      %v1153 = vadd.f32 %v1151, %v1152
      %v1154 = vrot.slane %v1153, 2
      %v1155 = vadd.f32 %v1153, %v1154
      %v1156 = vrot.slane %v1155, 1
      %v1157 = vadd.f32 %v1155, %v1156
      %v1158 = vadd.f32 %v1140, %v1144
      %v1159 = vsel %vm1112, %v1148, 0.0
      %v1160 = vadd.f32 %v1158, %v1159
      %v1161 = vrot.slane %v1160, 4
      %v1162 = vadd.f32 %v1160, %v1161
      %v1163 = vrot.slane %v1162, 2
      %v1164 = vadd.f32 %v1162, %v1163
      %v1165 = vrot.slane %v1164, 1
      %v1166 = vadd.f32 %v1164, %v1165
      %v1167 = vlaneseq
      %v1168 = vshrl.u32 %v1167, 7
      %v1169 = vsub.s32 4, %v1168
      %v1170 = vrot.slane %v1110, %v1169
      %v1171 = vlaneseq
      %v1172 = vshrl.u32 %v1171, 7
      %v1173 = vsub.s32 4, %v1172
      %v1174 = vrot.slane %v1111, %v1173
      %vm1175 = vcmp.eq.s32.totalorder %v434, %v1170
      %vm1176 = vcmp.eq.s32.totalorder %v434, %v1174
      %vm1177 = vcmp.eq.s32.totalorder %v435, %v1170
      %vm1178 = vcmp.eq.s32.totalorder %v435, %v1174
      %vm1179 = vcmp.eq.s32.totalorder %v436, %v1170
      %vm1180 = vcmp.eq.s32.totalorder %v436, %v1174
      %v1181 = vsel %vm1175, %v1131, 0.0
      %v1182 = vsel %vm1176, %v1132, 0.0
      %v1183 = vsel %vm1177, %v1133, 0.0
      %v1184 = vsel %vm1178, %v1134, 0.0
      %v1185 = vsel %vm1179, %v1135, 0.0
      %v1186 = vsel %vm1180, %v1136, 0.0
      %v1187 = vadd.f32 %v1181, %v1183
      %v1188 = vsel %vm1112, %v1185, 0.0
      %v1189 = vadd.f32 %v1187, %v1188
      %v1190 = vrot.slane %v1189, 4
      %v1191 = vadd.f32 %v1189, %v1190
      %v1192 = vrot.slane %v1191, 2
      %v1193 = vadd.f32 %v1191, %v1192
      %v1194 = vrot.slane %v1193, 1
      %v1195 = vadd.f32 %v1193, %v1194
      %v1196 = vadd.f32 %v1182, %v1184
      %v1197 = vsel %vm1112, %v1186, 0.0
      %v1198 = vadd.f32 %v1196, %v1197
      %v1199 = vrot.slane %v1198, 4
      %v1200 = vadd.f32 %v1198, %v1199
      %v1201 = vrot.slane %v1200, 2
      %v1202 = vadd.f32 %v1200, %v1201
      %v1203 = vrot.slane %v1202, 1
      %v1204 = vadd.f32 %v1202, %v1203
      %v1205 = vlog2.pop %v1157
      %v1206 = vmul.f32 %v1205, 0.6931472
      %v1207 = vlog2.pop %v1166
      %v1208 = vmul.f32 %v1207, 0.6931472
      %v1209 = vsub.f32 %v1206, %v1195
      %v1210 = vsub.f32 %v1208, %v1204
      %v1211 = vmul.f32 %v802, 0.5
      %v1212 = vmul.f32 %v804, 0.5
      %v1215 = vrot.slane %v1211, 2
      %v1216 = vrot.slane %v1212, 2
      %v1219 = vsub.f32 %v802, %v1215
      %v1220 = vsub.f32 %v804, %v1216
      %v1221 = vadd.f32 %v802, %v1215
      %v1222 = vadd.f32 %v804, %v1216
      %v1223 = vsub.f32 %v1219, %v1100
      %v1224 = vsub.f32 %v1220, %v1102
      %v1225 = vand.u32 2147483647, %v1223
      %v1226 = vand.u32 2147483647, %v1224
      %vm1227 = vcmp.lt.f32.partialorder %v1225, 1.0
      %vm1228 = vcmp.lt.f32.partialorder %v1226, 1.0
      %v1229 = vmul.f32 %v1225, 0.5
      %v1230 = vmul.f32 %v1226, 0.5
      %v1231 = vmul.f32 %v1229, %v1225
      %v1232 = vmul.f32 %v1230, %v1226
      %v1233 = vsub.f32 %v1225, 0.5
      %v1234 = vsub.f32 %v1226, 0.5
      %v1235 = vsel %vm1227, %v1231, %v1233
      %v1236 = vsel %vm1228, %v1232, %v1234
      %v1239 = vrot.slane %v1235, 1
      %v1240 = vrot.slane %v1236, 1
      %v1243 = vadd.f32 %v1235, %v1239
      %v1244 = vadd.f32 %v1236, %v1240
      %v1247 = vrot.slane %v1100, 2
      %v1248 = vrot.slane %v1102, 2
      %v1251 = vsub.f32 %v1221, %v1247
      %v1252 = vsub.f32 %v1222, %v1248
      %v1253 = vand.u32 2147483647, %v1251
      %v1254 = vand.u32 2147483647, %v1252
      %vm1255 = vcmp.lt.f32.partialorder %v1253, 1.0
      %vm1256 = vcmp.lt.f32.partialorder %v1254, 1.0
      %v1257 = vmul.f32 %v1253, 0.5
      %v1258 = vmul.f32 %v1254, 0.5
      %v1259 = vmul.f32 %v1257, %v1253
      %v1260 = vmul.f32 %v1258, %v1254
      %v1261 = vsub.f32 %v1253, 0.5
      %v1262 = vsub.f32 %v1254, 0.5
      %v1263 = vsel %vm1255, %v1259, %v1261
      %v1264 = vsel %vm1256, %v1260, %v1262
      %v1265 = vadd.f32 %v1243, %v1263
      %v1266 = vadd.f32 %v1244, %v1264
      %v1269 = vrot.slane %v1263, 1
      %v1270 = vrot.slane %v1264, 1
      %v1273 = vadd.f32 %v1265, %v1269
      %v1274 = vadd.f32 %v1266, %v1270
      %vm1275 = vcmask 48168
      %v1276 = vsel %vm1275, %v421, 0.0
      %v1277 = vrot.slane %v1276, 4
      %v1278 = vadd.f32 %v1276, %v1277
      %v1279 = vrot.slane %v1278, 2
      %v1280 = vadd.f32 %v1278, %v1279
      %v1281 = vrot.slane %v1280, 1
      %v1282 = vadd.f32 %v1280, %v1281
      %vm1283 = vcmp.gt.f32.partialorder %v1282, 0.0
      %vm1284 = vmxor %vm1283, 1
      %v1285 = vsel %vm1284, 1, 0
      %1286 = vset.pattern.permute.xlu0 5
      %1287 = vperm.xlu0 %1286, %v1285
      %v1288 = vpop.permute.xlu0 %1287
      %vm1289 = vcmp.eq.s32.totalorder %v1288, 1
      %vm1290 = vmor %vm1021, %vm1289
      %vm1291 = vmor %vm1022, %vm1289
      %vm1292 = vmand %vm431, %vm1290
      %vm1293 = vmand %vm432, %vm1291
      %v1294 = vsel %vm1023, %v1209, 0.0
      %v1295 = vsel %vm1024, %v1210, 0.0
      %v1296 = vsel %vm1023, %v1273, 0.0
      %v1297 = vsel %vm1024, %v1274, 0.0
      %v1298 = vsel %vm1292, %v1209, -inf
      %v1299 = vsel %vm1293, %v1210, -inf
      %v1302 = vrot.slane %v1296, 7
      %v1303 = vrot.slane %v1297, 7
      %vm1306 = vcmask 1040384
      %v1307 = vsel %vm1306, %v1294, %v1302
      %v1308 = vsel %vm1306, %v1295, %v1303
      %vm1309 = vcmask 1041408
      %v1310 = vsel %vm1309, %v1307, %v1027
      %v1311 = vsel %vm1309, %v1308, %v1028
      %vm1312 = vcmask 1042432
      %v1313 = vsel %vm1312, %v1310, %v1298
      %v1314 = vsel %vm1312, %v1311, %v1299
      %v1317 = vcombine.low %v1313, %v1314
      %1319 = vst [vmem:[%s354] sm:$0xff] %v1317
      %s1320 = smul.u32 2, %s21
      %p1321 = scmp.lt.s32.totalorder %s20, 1
      %s1322 = scalar_select %p1321, %s20, 1
      %p1323 = scmp.lt.s32.totalorder %s1320, 1
      %s1324 = scalar_select %p1323, %s1320, 1
      %s1325 = smul.addr %s1322, 2
      %s1326 = sadd.s32 %s1324, %s1325
      %s1327 = smul.addr %s1326, 4
      %s1328 = scalar_lea.vmem %s5, %s1327
      // Predicated region
      $region41: #{detection_loss.1} parent=39 // pred_check
        %p1329 = pneg %p182
      $region42: #{detection_loss.1} parent=39 // pred_check_branch
        %1331 = sbr.rel (%p1329) target = $region44
      $region43: #{detection_loss.1} parent=39 // pred_region
        %s1332 = smul.u32 2, %s21
      $region44: #{detection_loss.1} parent=39 // pred_fallthru
        _
    $region40: #{detection_loss.1} parent=5 // pred_fallthru
      _
    %p1333 = scmp.le.s32.totalorder 2, %s11
    // Predicated region
    $region45: #{detection_loss.1} parent=5 // pred_check
      %p1334 = pneg %p1333
    $region46: #{detection_loss.1} parent=5 // pred_check_branch
      %1336 = sbr.rel (%p1334) target = $region48
    $region47: #{detection_loss.1} parent=5 // pred_region
      %s1337 = ssub.s32 %s11, 2
      // Predicated region
      $region49: #{detection_loss.1} parent=47 // pred_check
        %p1338 = pneg %p188
      $region50: #{detection_loss.1} parent=47 // pred_check_branch
        %1340 = sbr.rel (%p1338) target = $region52
      $region51: #{detection_loss.1} parent=47 // pred_region
        %s1341 = smul.u32 2, %s23
        %p1342 = scmp.lt.s32.totalorder %s22, 1
        %s1343 = scalar_select %p1342, %s22, 1
        %p1344 = scmp.lt.s32.totalorder %s1341, 1
        %s1345 = scalar_select %p1344, %s1341, 1
        %s1346 = smul.addr %s1343, 2
        %s1347 = sadd.s32 %s1345, %s1346
        %s1348 = smul.addr %s1347, 4
        %s1349 = scalar_lea.vmem %s5, %s1348
      $region52: #{detection_loss.1} parent=47 // pred_fallthru
        _
    $region48: #{detection_loss.1} parent=5 // pred_fallthru
      _
  $region6: #{detection_loss.1} parent=0 // loop_footer
    %s15 = sadd.s32 1, %s11
  $region7: #{detection_loss.1} parent=0 // loop_footer_branch
    %10 = sbr.rel target = $region3
  $region8: #{detection_loss.1} parent=0 // loop_exit
    _

</llo_original>
